<compile_context>
chip_gen: v7x
topology: tpu7x:2x2x1
jax: 0.10.0
libtpu: 0.0.40
codegen_flags: <defaults>
</compile_context>

<pallas_src>
import jax
import jax.numpy as jnp
import numpy as np
from jax.experimental import pallas as pl
from jax.experimental.pallas import tpu as pltpu


def _round_up(x, m):
    return ((x + m - 1) // m) * m


# -----------------------------------------------------------------------------
# Pallas kernel
# -----------------------------------------------------------------------------
def _make_decode_kernel(T: int, L: int, H: int, Bp: int, has_rest: bool):
    """Single invocation: layer-major GRU recurrence + batched, lane-dense FC head."""

    def kernel(*refs):
        # refs: z_flat, h0, w0, [w_rest], u, bi, bhn, fc_w, fc_b | dec, hid
        z_ref, h0_ref, w0_ref = refs[0], refs[1], refs[2]
        i = 3
        if has_rest:
            w_rest_ref = refs[i]
            i += 1
        u_ref = refs[i]
        bi_ref = refs[i + 1]
        bhn_ref = refs[i + 2]
        fcw_ref = refs[i + 3]
        fcb_ref = refs[i + 4]
        dec_ref = refs[i + 5]
        hid_ref = refs[i + 6]

        f32 = jnp.float32

        x_flat = z_ref[...]                                  # (T*Bp, D) layer-0 input

        for l in range(L):
            W = w0_ref[...] if l == 0 else w_rest_ref[l - 1]  # (in, Gp)
            U = u_ref[l]                                      # (H, Gp)

            # Batched input projection for ALL timesteps (off the serial chain);
            # r/z biases are pre-folded (b_ih+b_hh), n's input bias included,
            # pad lanes are zero.
            gi_all = jnp.dot(x_flat, W, preferred_element_type=f32) + bi_ref[l]

            # Hoisted broadcast of the hidden-side n bias (JAX does not CSE
            # broadcast_in_dim; do it once per layer, not per step).
            bhn_b = jnp.broadcast_to(bhn_ref[l], (Bp, H))

            h = h0_ref[l]                                     # (Bp, H)
            outs = []
            # Fully unrolled time loop: only ONE matmul (h @ U_all) per step on
            # the critical path; gate split is static lane slicing (XLU/VPU).
            for t in range(T):
                gi = gi_all[t * Bp:(t + 1) * Bp, :]           # (Bp, Gp) static rows
                gh = jnp.dot(h, U, preferred_element_type=f32)  # (Bp, Gp)
                rz = jax.nn.sigmoid(gi[:, :2 * H] + gh[:, :2 * H])  # one 2H-wide sigmoid
                r = rz[:, :H]
                zg = rz[:, H:2 * H]
                n = jnp.tanh(gi[:, 2 * H:3 * H] + r * (gh[:, 2 * H:3 * H] + bhn_b))
                h = (1.0 - zg) * n + zg * h
                outs.append(h)
            hid_ref[l] = h
            # Bp = 8 rows per step -> one sublane group each; layout-aligned concat.
            x_flat = jnp.concatenate(outs, axis=0)            # (T*Bp, H)

        # Batched FC head: one (T*Bp, H) @ (H, Ap) matmul, lane-dense 128-wide store.
        dec_ref[...] = (jnp.dot(x_flat, fcw_ref[...], preferred_element_type=f32)
                        + fcb_ref[...])

    return kernel


# -----------------------------------------------------------------------------
# One-time parameter packing (hoisted out of the per-call path)
# -----------------------------------------------------------------------------
def pack_decode_params(layer_params, fc_w, fc_b):
    """Pack PyTorch-layout GRU/Linear params into fused, lane-dense arrays.

    layer_params: list of L tuples (w_ih (3H, in), w_hh (3H, H), b_ih (3H,), b_hh (3H,))
    fc_w: (A, H), fc_b: (A,)
    """
    L = len(layer_params)
    H = layer_params[0][1].shape[1]
    D = layer_params[0][0].shape[1]
    A = fc_w.shape[0]
    G3 = 3 * H
    Gp = _round_up(G3, 128)       # fused gate width, lane-dense
    Ap = _round_up(A, 128)        # fused FC output width, lane-dense

    def gates_T_pad(w):
        # (3H, in) -> (in, Gp) with gate-major lane layout [Wr | Wz | Wn | 0pad]
        w = jnp.asarray(w, jnp.float32)
        wt = jnp.concatenate([w[g * H:(g + 1) * H, :].T for g in range(3)], axis=1)
        return jnp.pad(wt, ((0, 0), (0, Gp - G3)))

    w0 = None
    w_rest, u_all, bi_all, bhn_all = [], [], [], []
    for l, (w_ih, w_hh, b_ih, b_hh) in enumerate(layer_params):
        wt = gates_T_pad(w_ih)
        if l == 0:
            w0 = wt                                    # (D, Gp)
        else:
            w_rest.append(wt)                          # (H, Gp)
        u_all.append(gates_T_pad(w_hh))                # (H, Gp)
        b_ih = jnp.asarray(b_ih, jnp.float32)
        b_hh = jnp.asarray(b_hh, jnp.float32)
        bi = jnp.concatenate([
            b_ih[0:H] + b_hh[0:H],                     # fused r bias
            b_ih[H:2 * H] + b_hh[H:2 * H],             # fused z bias
            b_ih[2 * H:3 * H],                         # n: input-side bias
        ])
        bi_all.append(jnp.pad(bi, (0, Gp - G3))[None, :])   # (1, Gp)
        bhn_all.append(b_hh[2 * H:3 * H][None, :])          # (1, H) hidden-side n bias

    return dict(
        w0=w0,
        w_rest=(jnp.stack(w_rest, axis=0) if L > 1 else None),   # (L-1, H, Gp)
        u=jnp.stack(u_all, axis=0),                              # (L, H, Gp)
        bi=jnp.stack(bi_all, axis=0),                            # (L, 1, Gp)
        bhn=jnp.stack(bhn_all, axis=0),                          # (L, 1, H)
        fc_w=jnp.pad(jnp.asarray(fc_w, jnp.float32).T, ((0, 0), (0, Ap - A))),  # (H, Ap)
        fc_b=jnp.pad(jnp.asarray(fc_b, jnp.float32), (0, Ap - A))[None, :],     # (1, Ap)
        dims=dict(L=L, H=H, D=D, A=A, Gp=Gp, Ap=Ap),
    )


# -----------------------------------------------------------------------------
# Per-call wrapper
# -----------------------------------------------------------------------------
def vae_decode_pallas(z, h0, packed):
    """Pallas implementation of VAE_decode.forward.

    z:  (T, B, D) float32
    h0: (L, B, H) float32
    packed: output of pack_decode_params (pre-packed once at model load).
    returns (decoded (T, B, A), hidden (L, B, H))
    """
    dims = packed["dims"]
    L, H, D, A, Ap = dims["L"], dims["H"], dims["D"], dims["A"], dims["Ap"]
    T, B, _ = z.shape

    # Pad batch to the 8-sublane width; flatten time into rows for the batched
    # input projection.
    Bp = max(8, _round_up(B, 8))
    z32 = jnp.asarray(z, jnp.float32)
    h032 = jnp.asarray(h0, jnp.float32)
    if Bp != B:
        z_pad = jnp.zeros((T, Bp, D), jnp.float32).at[:, :B].set(z32)
        h0_pad = jnp.zeros((L, Bp, H), jnp.float32).at[:, :B].set(h032)
    else:
        z_pad, h0_pad = z32, h032
    z_flat = z_pad.reshape(T * Bp, D)

    has_rest = L > 1
    inputs = [z_flat, h0_pad, packed["w0"]]
    if has_rest:
        inputs.append(packed["w_rest"])
    inputs += [packed["u"], packed["bi"], packed["bhn"], packed["fc_w"], packed["fc_b"]]

    def full_spec(arr):
        nd = arr.ndim
        return pl.BlockSpec(arr.shape, lambda i, _nd=nd: (0,) * _nd)

    in_specs = [full_spec(a) for a in inputs]
    out_specs = [
        pl.BlockSpec((T * Bp, Ap), lambda i: (0, 0)),       # lane-dense decoded slab
        pl.BlockSpec((L, Bp, H), lambda i: (0, 0, 0)),       # final hidden
    ]

    kernel = _make_decode_kernel(T, L, H, Bp, has_rest)

    grid_spec = pltpu.PrefetchScalarGridSpec(
        num_scalar_prefetch=0,
        grid=(1,),                                           # single invocation
        in_specs=in_specs,
        out_specs=out_specs,
    )

    dec_flat, hidden_pad = pl.pallas_call(
        kernel,
        grid_spec=grid_spec,
        out_shape=(
            jax.ShapeDtypeStruct((T * Bp, Ap), jnp.float32),
            jax.ShapeDtypeStruct((L, Bp, H), jnp.float32),
        ),
        compiler_params=pltpu.CompilerParams(
            dimension_semantics=("arbitrary",),
        ),
    )(*inputs)

    # TODO(synk): at large B on v7x, add a leading "parallel" grid axis to split
    # the batch across the two TensorCores; at B<=8 the recurrence is
    # latency-bound and the split is pure overhead.
    decoded = dec_flat.reshape(T, Bp, Ap)[:, :B, :A]
    hidden = hidden_pad[:, :B, :]
    return decoded, hidden


# -----------------------------------------------------------------------------
# Pure-JAX reference (mirrors PyTorch nn.GRU + nn.Linear semantics)
# -----------------------------------------------------------------------------
def vae_decode_reference(z, h0, layer_params, fc_w, fc_b):
    T = z.shape[0]
    L = h0.shape[0]
    H = h0.shape[2]
    h = [h0[l] for l in range(L)]
    outs = []
    for t in range(T):
        x = z[t]
        for l, (w_ih, w_hh, b_ih, b_hh) in enumerate(layer_params):
            gi = x @ w_ih.T + b_ih
            gh = h[l] @ w_hh.T + b_hh
            r = jax.nn.sigmoid(gi[:, 0:H] + gh[:, 0:H])
            zg = jax.nn.sigmoid(gi[:, H:2 * H] + gh[:, H:2 * H])
            n = jnp.tanh(gi[:, 2 * H:3 * H] + r * gh[:, 2 * H:3 * H])
            h[l] = (1.0 - zg) * n + zg * h[l]
            x = h[l]
        outs.append(x @ fc_w.T + fc_b)
    return jnp.stack(outs, axis=0), jnp.stack(h, axis=0)


# -----------------------------------------------------------------------------
# Main
# -----------------------------------------------------------------------------
if __name__ == "__main__":
    SEQ_LEN = 8          # T
    BATCH = 4            # B
    LATENT_DIM = 16      # D  (latent_dimension)
    GRU_STACK = 2        # L  (gru_stack_size)
    GRU_NEURONS = 32     # H  (gru_neurons_num)
    LEN_ALPHABET = 16    # A  (len_alphabet, global in the original script)

    key = jax.random.PRNGKey(0)
    keys = jax.random.split(key, 4 * GRU_STACK + 4)

    k = 1.0 / np.sqrt(GRU_NEURONS)
    layer_params = []
    ki = 0
    for l in range(GRU_STACK):
        in_dim = LATENT_DIM if l == 0 else GRU_NEURONS
        w_ih = jax.random.uniform(keys[ki + 0], (3 * GRU_NEURONS, in_dim),
                                  jnp.float32, -k, k)
        w_hh = jax.random.uniform(keys[ki + 1], (3 * GRU_NEURONS, GRU_NEURONS),
                                  jnp.float32, -k, k)
        b_ih = jax.random.uniform(keys[ki + 2], (3 * GRU_NEURONS,), jnp.float32, -k, k)
        b_hh = jax.random.uniform(keys[ki + 3], (3 * GRU_NEURONS,), jnp.float32, -k, k)
        layer_params.append((w_ih, w_hh, b_ih, b_hh))
        ki += 4

    kf = 1.0 / np.sqrt(GRU_NEURONS)
    fc_w = jax.random.uniform(keys[ki + 0], (LEN_ALPHABET, GRU_NEURONS),
                              jnp.float32, -kf, kf)
    fc_b = jax.random.uniform(keys[ki + 1], (LEN_ALPHABET,), jnp.float32, -kf, kf)

    z = jax.random.normal(keys[ki + 2], (SEQ_LEN, BATCH, LATENT_DIM), jnp.float32)
    h0 = jnp.zeros((GRU_STACK, BATCH, GRU_NEURONS), jnp.float32)  # init_hidden()

    # Pack weights ONCE (model-load time), outside the per-call path.
    packed = pack_decode_params(layer_params, fc_w, fc_b)
    packed = jax.tree_util.tree_map(
        lambda a: jax.block_until_ready(a) if isinstance(a, jax.Array) else a, packed)

    decoded, hidden = vae_decode_pallas(z, h0, packed)
    decoded = jax.block_until_ready(decoded)
    hidden = jax.block_until_ready(hidden)

    dec_ref, hid_ref = vae_decode_reference(z, h0, layer_params, fc_w, fc_b)
    assert decoded.shape == (SEQ_LEN, BATCH, LEN_ALPHABET)
    assert hidden.shape == (GRU_STACK, BATCH, GRU_NEURONS)
    np.testing.assert_allclose(np.asarray(decoded), np.asarray(dec_ref),
                               rtol=1e-4, atol=1e-4)
    np.testing.assert_allclose(np.asarray(hidden), np.asarray(hid_ref),
                               rtol=1e-4, atol=1e-4)

    print("KERNEL_OK")
</pallas_src>

<mosaic_0001>
module attributes {stable_mosaic.version = 11 : i64} {
  func.func @kernel(%arg0: i32, %arg1: memref<64x16xf32, #tpu.memory_space<vmem>>, %arg2: memref<2x8x32xf32, #tpu.memory_space<vmem>>, %arg3: memref<16x128xf32, #tpu.memory_space<vmem>>, %arg4: memref<1x32x128xf32, #tpu.memory_space<vmem>>, %arg5: memref<2x32x128xf32, #tpu.memory_space<vmem>>, %arg6: memref<2x1x128xf32, #tpu.memory_space<vmem>>, %arg7: memref<2x1x32xf32, #tpu.memory_space<vmem>>, %arg8: memref<32x128xf32, #tpu.memory_space<vmem>>, %arg9: memref<1x128xf32, #tpu.memory_space<vmem>>, %arg10: memref<64x128xf32, #tpu.memory_space<vmem>>, %arg11: memref<2x8x32xf32, #tpu.memory_space<vmem>>) attributes {dimension_semantics = [#tpu.dimension_semantics<arbitrary>], iteration_bounds = array<i64: 1>, scalar_prefetch = 0 : i64, scratch_operands = 0 : i64, tpu.core_type = #tpu.core_type<tc>, window_params = [{pipeline_mode = #tpu.pipeline_mode<synchronous>, transform_indices = @transform_0, window_bounds = array<i64: 64, 16>}, {pipeline_mode = #tpu.pipeline_mode<synchronous>, transform_indices = @transform_1, window_bounds = array<i64: 2, 8, 32>}, {pipeline_mode = #tpu.pipeline_mode<synchronous>, transform_indices = @transform_2, window_bounds = array<i64: 16, 128>}, {pipeline_mode = #tpu.pipeline_mode<synchronous>, transform_indices = @transform_3, window_bounds = array<i64: 1, 32, 128>}, {pipeline_mode = #tpu.pipeline_mode<synchronous>, transform_indices = @transform_4, window_bounds = array<i64: 2, 32, 128>}, {pipeline_mode = #tpu.pipeline_mode<synchronous>, transform_indices = @transform_5, window_bounds = array<i64: 2, 1, 128>}, {pipeline_mode = #tpu.pipeline_mode<synchronous>, transform_indices = @transform_6, window_bounds = array<i64: 2, 1, 32>}, {pipeline_mode = #tpu.pipeline_mode<synchronous>, transform_indices = @transform_7, window_bounds = array<i64: 32, 128>}, {pipeline_mode = #tpu.pipeline_mode<synchronous>, transform_indices = @transform_8, window_bounds = array<i64: 1, 128>}, {pipeline_mode = #tpu.pipeline_mode<synchronous>, transform_indices = @transform_9, window_bounds = array<i64: 64, 128>}, {pipeline_mode = #tpu.pipeline_mode<synchronous>, transform_indices = @transform_10, window_bounds = array<i64: 2, 8, 32>}]} {
    %c0 = arith.constant 0 : index
    %c0_0 = arith.constant 0 : index
    %0 = vector.load %arg1[%c0, %c0_0] : memref<64x16xf32, #tpu.memory_space<vmem>>, vector<64x16xf32>
    %c0_1 = arith.constant 0 : index
    %c0_2 = arith.constant 0 : index
    %1 = vector.load %arg3[%c0_1, %c0_2] : memref<16x128xf32, #tpu.memory_space<vmem>>, vector<16x128xf32>
    %c0_3 = arith.constant 0 : index
    %c0_4 = arith.constant 0 : index
    %c0_5 = arith.constant 0 : index
    %2 = vector.load %arg5[%c0_3, %c0_4, %c0_5] : memref<2x32x128xf32, #tpu.memory_space<vmem>>, vector<1x32x128xf32>
    %3 = vector.shape_cast %2 : vector<1x32x128xf32> to vector<32x128xf32>
    %cst = arith.constant dense<0.000000e+00> : vector<64x128xf32>
    %4 = tpu.matmul %0, %1, %cst {dimension_numbers = #tpu.dot_dimension_numbers<[1], [0], [0], [1], [0, 0, 1, 1], [], []>} : vector<64x16xf32>, vector<16x128xf32>, vector<64x128xf32> -> vector<64x128xf32>
    %c0_6 = arith.constant 0 : index
    %c0_7 = arith.constant 0 : index
    %c0_8 = arith.constant 0 : index
    %5 = vector.load %arg6[%c0_6, %c0_7, %c0_8] : memref<2x1x128xf32, #tpu.memory_space<vmem>>, vector<1x1x128xf32>
    %6 = vector.shape_cast %5 : vector<1x1x128xf32> to vector<1x128xf32>
    %7 = vector.broadcast %6 : vector<1x128xf32> to vector<64x128xf32>
    %8 = arith.addf %4, %7 : vector<64x128xf32>
    %c0_9 = arith.constant 0 : index
    %c0_10 = arith.constant 0 : index
    %c0_11 = arith.constant 0 : index
    %9 = vector.load %arg7[%c0_9, %c0_10, %c0_11] : memref<2x1x32xf32, #tpu.memory_space<vmem>>, vector<1x1x32xf32>
    %10 = vector.shape_cast %9 : vector<1x1x32xf32> to vector<1x32xf32>
    %11 = vector.shape_cast %10 : vector<1x32xf32> to vector<1x32xf32>
    %12 = vector.broadcast %11 : vector<1x32xf32> to vector<8x32xf32>
    %c0_12 = arith.constant 0 : index
    %c0_13 = arith.constant 0 : index
    %c0_14 = arith.constant 0 : index
    %13 = vector.load %arg2[%c0_12, %c0_13, %c0_14] : memref<2x8x32xf32, #tpu.memory_space<vmem>>, vector<1x8x32xf32>
    %14 = vector.shape_cast %13 : vector<1x8x32xf32> to vector<8x32xf32>
    %15 = vector.extract_strided_slice %8 {offsets = [0, 0], sizes = [8, 128], strides = [1, 1]} : vector<64x128xf32> to vector<8x128xf32>
    %cst_15 = arith.constant dense<0.000000e+00> : vector<8x128xf32>
    %16 = tpu.matmul %14, %3, %cst_15 {dimension_numbers = #tpu.dot_dimension_numbers<[1], [0], [0], [1], [0, 0, 1, 1], [], []>} : vector<8x32xf32>, vector<32x128xf32>, vector<8x128xf32> -> vector<8x128xf32>
    %17 = vector.extract_strided_slice %15 {offsets = [0, 0], sizes = [8, 64], strides = [1, 1]} : vector<8x128xf32> to vector<8x64xf32>
    %18 = vector.extract_strided_slice %16 {offsets = [0, 0], sizes = [8, 64], strides = [1, 1]} : vector<8x128xf32> to vector<8x64xf32>
    %19 = arith.addf %17, %18 : vector<8x64xf32>
    %20 = arith.negf %19 : vector<8x64xf32>
    %21 = math.exp %20 : vector<8x64xf32>
    %cst_16 = arith.constant 1.000000e+00 : f32
    %22 = vector.broadcast %cst_16 : f32 to vector<8x64xf32>
    %23 = arith.addf %22, %21 : vector<8x64xf32>
    %24 = arith.divf %22, %23 : vector<8x64xf32>
    %25 = vector.extract_strided_slice %24 {offsets = [0, 0], sizes = [8, 32], strides = [1, 1]} : vector<8x64xf32> to vector<8x32xf32>
    %26 = vector.extract_strided_slice %24 {offsets = [0, 32], sizes = [8, 32], strides = [1, 1]} : vector<8x64xf32> to vector<8x32xf32>
    %27 = vector.extract_strided_slice %15 {offsets = [0, 64], sizes = [8, 32], strides = [1, 1]} : vector<8x128xf32> to vector<8x32xf32>
    %28 = vector.extract_strided_slice %16 {offsets = [0, 64], sizes = [8, 32], strides = [1, 1]} : vector<8x128xf32> to vector<8x32xf32>
    %29 = arith.addf %28, %12 : vector<8x32xf32>
    %30 = arith.mulf %25, %29 : vector<8x32xf32>
    %31 = arith.addf %27, %30 : vector<8x32xf32>
    %32 = math.tanh %31 : vector<8x32xf32>
    %cst_17 = arith.constant 1.000000e+00 : f32
    %33 = vector.broadcast %cst_17 : f32 to vector<8x32xf32>
    %34 = arith.subf %33, %26 : vector<8x32xf32>
    %35 = arith.mulf %34, %32 : vector<8x32xf32>
    %36 = arith.mulf %26, %14 : vector<8x32xf32>
    %37 = arith.addf %35, %36 : vector<8x32xf32>
    %38 = vector.extract_strided_slice %8 {offsets = [8, 0], sizes = [8, 128], strides = [1, 1]} : vector<64x128xf32> to vector<8x128xf32>
    %cst_18 = arith.constant dense<0.000000e+00> : vector<8x128xf32>
    %39 = tpu.matmul %37, %3, %cst_18 {dimension_numbers = #tpu.dot_dimension_numbers<[1], [0], [0], [1], [0, 0, 1, 1], [], []>} : vector<8x32xf32>, vector<32x128xf32>, vector<8x128xf32> -> vector<8x128xf32>
    %40 = vector.extract_strided_slice %38 {offsets = [0, 0], sizes = [8, 64], strides = [1, 1]} : vector<8x128xf32> to vector<8x64xf32>
    %41 = vector.extract_strided_slice %39 {offsets = [0, 0], sizes = [8, 64], strides = [1, 1]} : vector<8x128xf32> to vector<8x64xf32>
    %42 = arith.addf %40, %41 : vector<8x64xf32>
    %43 = arith.negf %42 : vector<8x64xf32>
    %44 = math.exp %43 : vector<8x64xf32>
    %cst_19 = arith.constant 1.000000e+00 : f32
    %45 = vector.broadcast %cst_19 : f32 to vector<8x64xf32>
    %46 = arith.addf %45, %44 : vector<8x64xf32>
    %47 = arith.divf %45, %46 : vector<8x64xf32>
    %48 = vector.extract_strided_slice %47 {offsets = [0, 0], sizes = [8, 32], strides = [1, 1]} : vector<8x64xf32> to vector<8x32xf32>
    %49 = vector.extract_strided_slice %47 {offsets = [0, 32], sizes = [8, 32], strides = [1, 1]} : vector<8x64xf32> to vector<8x32xf32>
    %50 = vector.extract_strided_slice %38 {offsets = [0, 64], sizes = [8, 32], strides = [1, 1]} : vector<8x128xf32> to vector<8x32xf32>
    %51 = vector.extract_strided_slice %39 {offsets = [0, 64], sizes = [8, 32], strides = [1, 1]} : vector<8x128xf32> to vector<8x32xf32>
    %52 = arith.addf %51, %12 : vector<8x32xf32>
    %53 = arith.mulf %48, %52 : vector<8x32xf32>
    %54 = arith.addf %50, %53 : vector<8x32xf32>
    %55 = math.tanh %54 : vector<8x32xf32>
    %cst_20 = arith.constant 1.000000e+00 : f32
    %56 = vector.broadcast %cst_20 : f32 to vector<8x32xf32>
    %57 = arith.subf %56, %49 : vector<8x32xf32>
    %58 = arith.mulf %57, %55 : vector<8x32xf32>
    %59 = arith.mulf %49, %37 : vector<8x32xf32>
    %60 = arith.addf %58, %59 : vector<8x32xf32>
    %61 = vector.extract_strided_slice %8 {offsets = [16, 0], sizes = [8, 128], strides = [1, 1]} : vector<64x128xf32> to vector<8x128xf32>
    %cst_21 = arith.constant dense<0.000000e+00> : vector<8x128xf32>
    %62 = tpu.matmul %60, %3, %cst_21 {dimension_numbers = #tpu.dot_dimension_numbers<[1], [0], [0], [1], [0, 0, 1, 1], [], []>} : vector<8x32xf32>, vector<32x128xf32>, vector<8x128xf32> -> vector<8x128xf32>
    %63 = vector.extract_strided_slice %61 {offsets = [0, 0], sizes = [8, 64], strides = [1, 1]} : vector<8x128xf32> to vector<8x64xf32>
    %64 = vector.extract_strided_slice %62 {offsets = [0, 0], sizes = [8, 64], strides = [1, 1]} : vector<8x128xf32> to vector<8x64xf32>
    %65 = arith.addf %63, %64 : vector<8x64xf32>
    %66 = arith.negf %65 : vector<8x64xf32>
    %67 = math.exp %66 : vector<8x64xf32>
    %cst_22 = arith.constant 1.000000e+00 : f32
    %68 = vector.broadcast %cst_22 : f32 to vector<8x64xf32>
    %69 = arith.addf %68, %67 : vector<8x64xf32>
    %70 = arith.divf %68, %69 : vector<8x64xf32>
    %71 = vector.extract_strided_slice %70 {offsets = [0, 0], sizes = [8, 32], strides = [1, 1]} : vector<8x64xf32> to vector<8x32xf32>
    %72 = vector.extract_strided_slice %70 {offsets = [0, 32], sizes = [8, 32], strides = [1, 1]} : vector<8x64xf32> to vector<8x32xf32>
    %73 = vector.extract_strided_slice %61 {offsets = [0, 64], sizes = [8, 32], strides = [1, 1]} : vector<8x128xf32> to vector<8x32xf32>
    %74 = vector.extract_strided_slice %62 {offsets = [0, 64], sizes = [8, 32], strides = [1, 1]} : vector<8x128xf32> to vector<8x32xf32>
    %75 = arith.addf %74, %12 : vector<8x32xf32>
    %76 = arith.mulf %71, %75 : vector<8x32xf32>
    %77 = arith.addf %73, %76 : vector<8x32xf32>
    %78 = math.tanh %77 : vector<8x32xf32>
    %cst_23 = arith.constant 1.000000e+00 : f32
    %79 = vector.broadcast %cst_23 : f32 to vector<8x32xf32>
    %80 = arith.subf %79, %72 : vector<8x32xf32>
    %81 = arith.mulf %80, %78 : vector<8x32xf32>
    %82 = arith.mulf %72, %60 : vector<8x32xf32>
    %83 = arith.addf %81, %82 : vector<8x32xf32>
    %84 = vector.extract_strided_slice %8 {offsets = [24, 0], sizes = [8, 128], strides = [1, 1]} : vector<64x128xf32> to vector<8x128xf32>
    %cst_24 = arith.constant dense<0.000000e+00> : vector<8x128xf32>
    %85 = tpu.matmul %83, %3, %cst_24 {dimension_numbers = #tpu.dot_dimension_numbers<[1], [0], [0], [1], [0, 0, 1, 1], [], []>} : vector<8x32xf32>, vector<32x128xf32>, vector<8x128xf32> -> vector<8x128xf32>
    %86 = vector.extract_strided_slice %84 {offsets = [0, 0], sizes = [8, 64], strides = [1, 1]} : vector<8x128xf32> to vector<8x64xf32>
    %87 = vector.extract_strided_slice %85 {offsets = [0, 0], sizes = [8, 64], strides = [1, 1]} : vector<8x128xf32> to vector<8x64xf32>
    %88 = arith.addf %86, %87 : vector<8x64xf32>
    %89 = arith.negf %88 : vector<8x64xf32>
    %90 = math.exp %89 : vector<8x64xf32>
    %cst_25 = arith.constant 1.000000e+00 : f32
    %91 = vector.broadcast %cst_25 : f32 to vector<8x64xf32>
    %92 = arith.addf %91, %90 : vector<8x64xf32>
    %93 = arith.divf %91, %92 : vector<8x64xf32>
    %94 = vector.extract_strided_slice %93 {offsets = [0, 0], sizes = [8, 32], strides = [1, 1]} : vector<8x64xf32> to vector<8x32xf32>
    %95 = vector.extract_strided_slice %93 {offsets = [0, 32], sizes = [8, 32], strides = [1, 1]} : vector<8x64xf32> to vector<8x32xf32>
    %96 = vector.extract_strided_slice %84 {offsets = [0, 64], sizes = [8, 32], strides = [1, 1]} : vector<8x128xf32> to vector<8x32xf32>
    %97 = vector.extract_strided_slice %85 {offsets = [0, 64], sizes = [8, 32], strides = [1, 1]} : vector<8x128xf32> to vector<8x32xf32>
    %98 = arith.addf %97, %12 : vector<8x32xf32>
    %99 = arith.mulf %94, %98 : vector<8x32xf32>
    %100 = arith.addf %96, %99 : vector<8x32xf32>
    %101 = math.tanh %100 : vector<8x32xf32>
    %cst_26 = arith.constant 1.000000e+00 : f32
    %102 = vector.broadcast %cst_26 : f32 to vector<8x32xf32>
    %103 = arith.subf %102, %95 : vector<8x32xf32>
    %104 = arith.mulf %103, %101 : vector<8x32xf32>
    %105 = arith.mulf %95, %83 : vector<8x32xf32>
    %106 = arith.addf %104, %105 : vector<8x32xf32>
    %107 = vector.extract_strided_slice %8 {offsets = [32, 0], sizes = [8, 128], strides = [1, 1]} : vector<64x128xf32> to vector<8x128xf32>
    %cst_27 = arith.constant dense<0.000000e+00> : vector<8x128xf32>
    %108 = tpu.matmul %106, %3, %cst_27 {dimension_numbers = #tpu.dot_dimension_numbers<[1], [0], [0], [1], [0, 0, 1, 1], [], []>} : vector<8x32xf32>, vector<32x128xf32>, vector<8x128xf32> -> vector<8x128xf32>
    %109 = vector.extract_strided_slice %107 {offsets = [0, 0], sizes = [8, 64], strides = [1, 1]} : vector<8x128xf32> to vector<8x64xf32>
    %110 = vector.extract_strided_slice %108 {offsets = [0, 0], sizes = [8, 64], strides = [1, 1]} : vector<8x128xf32> to vector<8x64xf32>
    %111 = arith.addf %109, %110 : vector<8x64xf32>
    %112 = arith.negf %111 : vector<8x64xf32>
    %113 = math.exp %112 : vector<8x64xf32>
    %cst_28 = arith.constant 1.000000e+00 : f32
    %114 = vector.broadcast %cst_28 : f32 to vector<8x64xf32>
    %115 = arith.addf %114, %113 : vector<8x64xf32>
    %116 = arith.divf %114, %115 : vector<8x64xf32>
    %117 = vector.extract_strided_slice %116 {offsets = [0, 0], sizes = [8, 32], strides = [1, 1]} : vector<8x64xf32> to vector<8x32xf32>
    %118 = vector.extract_strided_slice %116 {offsets = [0, 32], sizes = [8, 32], strides = [1, 1]} : vector<8x64xf32> to vector<8x32xf32>
    %119 = vector.extract_strided_slice %107 {offsets = [0, 64], sizes = [8, 32], strides = [1, 1]} : vector<8x128xf32> to vector<8x32xf32>
    %120 = vector.extract_strided_slice %108 {offsets = [0, 64], sizes = [8, 32], strides = [1, 1]} : vector<8x128xf32> to vector<8x32xf32>
    %121 = arith.addf %120, %12 : vector<8x32xf32>
    %122 = arith.mulf %117, %121 : vector<8x32xf32>
    %123 = arith.addf %119, %122 : vector<8x32xf32>
    %124 = math.tanh %123 : vector<8x32xf32>
    %cst_29 = arith.constant 1.000000e+00 : f32
    %125 = vector.broadcast %cst_29 : f32 to vector<8x32xf32>
    %126 = arith.subf %125, %118 : vector<8x32xf32>
    %127 = arith.mulf %126, %124 : vector<8x32xf32>
    %128 = arith.mulf %118, %106 : vector<8x32xf32>
    %129 = arith.addf %127, %128 : vector<8x32xf32>
    %130 = vector.extract_strided_slice %8 {offsets = [40, 0], sizes = [8, 128], strides = [1, 1]} : vector<64x128xf32> to vector<8x128xf32>
    %cst_30 = arith.constant dense<0.000000e+00> : vector<8x128xf32>
    %131 = tpu.matmul %129, %3, %cst_30 {dimension_numbers = #tpu.dot_dimension_numbers<[1], [0], [0], [1], [0, 0, 1, 1], [], []>} : vector<8x32xf32>, vector<32x128xf32>, vector<8x128xf32> -> vector<8x128xf32>
    %132 = vector.extract_strided_slice %130 {offsets = [0, 0], sizes = [8, 64], strides = [1, 1]} : vector<8x128xf32> to vector<8x64xf32>
    %133 = vector.extract_strided_slice %131 {offsets = [0, 0], sizes = [8, 64], strides = [1, 1]} : vector<8x128xf32> to vector<8x64xf32>
    %134 = arith.addf %132, %133 : vector<8x64xf32>
    %135 = arith.negf %134 : vector<8x64xf32>
    %136 = math.exp %135 : vector<8x64xf32>
    %cst_31 = arith.constant 1.000000e+00 : f32
    %137 = vector.broadcast %cst_31 : f32 to vector<8x64xf32>
    %138 = arith.addf %137, %136 : vector<8x64xf32>
    %139 = arith.divf %137, %138 : vector<8x64xf32>
    %140 = vector.extract_strided_slice %139 {offsets = [0, 0], sizes = [8, 32], strides = [1, 1]} : vector<8x64xf32> to vector<8x32xf32>
    %141 = vector.extract_strided_slice %139 {offsets = [0, 32], sizes = [8, 32], strides = [1, 1]} : vector<8x64xf32> to vector<8x32xf32>
    %142 = vector.extract_strided_slice %130 {offsets = [0, 64], sizes = [8, 32], strides = [1, 1]} : vector<8x128xf32> to vector<8x32xf32>
    %143 = vector.extract_strided_slice %131 {offsets = [0, 64], sizes = [8, 32], strides = [1, 1]} : vector<8x128xf32> to vector<8x32xf32>
    %144 = arith.addf %143, %12 : vector<8x32xf32>
    %145 = arith.mulf %140, %144 : vector<8x32xf32>
    %146 = arith.addf %142, %145 : vector<8x32xf32>
    %147 = math.tanh %146 : vector<8x32xf32>
    %cst_32 = arith.constant 1.000000e+00 : f32
    %148 = vector.broadcast %cst_32 : f32 to vector<8x32xf32>
    %149 = arith.subf %148, %141 : vector<8x32xf32>
    %150 = arith.mulf %149, %147 : vector<8x32xf32>
    %151 = arith.mulf %141, %129 : vector<8x32xf32>
    %152 = arith.addf %150, %151 : vector<8x32xf32>
    %153 = vector.extract_strided_slice %8 {offsets = [48, 0], sizes = [8, 128], strides = [1, 1]} : vector<64x128xf32> to vector<8x128xf32>
    %cst_33 = arith.constant dense<0.000000e+00> : vector<8x128xf32>
    %154 = tpu.matmul %152, %3, %cst_33 {dimension_numbers = #tpu.dot_dimension_numbers<[1], [0], [0], [1], [0, 0, 1, 1], [], []>} : vector<8x32xf32>, vector<32x128xf32>, vector<8x128xf32> -> vector<8x128xf32>
    %155 = vector.extract_strided_slice %153 {offsets = [0, 0], sizes = [8, 64], strides = [1, 1]} : vector<8x128xf32> to vector<8x64xf32>
    %156 = vector.extract_strided_slice %154 {offsets = [0, 0], sizes = [8, 64], strides = [1, 1]} : vector<8x128xf32> to vector<8x64xf32>
    %157 = arith.addf %155, %156 : vector<8x64xf32>
    %158 = arith.negf %157 : vector<8x64xf32>
    %159 = math.exp %158 : vector<8x64xf32>
    %cst_34 = arith.constant 1.000000e+00 : f32
    %160 = vector.broadcast %cst_34 : f32 to vector<8x64xf32>
    %161 = arith.addf %160, %159 : vector<8x64xf32>
    %162 = arith.divf %160, %161 : vector<8x64xf32>
    %163 = vector.extract_strided_slice %162 {offsets = [0, 0], sizes = [8, 32], strides = [1, 1]} : vector<8x64xf32> to vector<8x32xf32>
    %164 = vector.extract_strided_slice %162 {offsets = [0, 32], sizes = [8, 32], strides = [1, 1]} : vector<8x64xf32> to vector<8x32xf32>
    %165 = vector.extract_strided_slice %153 {offsets = [0, 64], sizes = [8, 32], strides = [1, 1]} : vector<8x128xf32> to vector<8x32xf32>
    %166 = vector.extract_strided_slice %154 {offsets = [0, 64], sizes = [8, 32], strides = [1, 1]} : vector<8x128xf32> to vector<8x32xf32>
    %167 = arith.addf %166, %12 : vector<8x32xf32>
    %168 = arith.mulf %163, %167 : vector<8x32xf32>
    %169 = arith.addf %165, %168 : vector<8x32xf32>
    %170 = math.tanh %169 : vector<8x32xf32>
    %cst_35 = arith.constant 1.000000e+00 : f32
    %171 = vector.broadcast %cst_35 : f32 to vector<8x32xf32>
    %172 = arith.subf %171, %164 : vector<8x32xf32>
    %173 = arith.mulf %172, %170 : vector<8x32xf32>
    %174 = arith.mulf %164, %152 : vector<8x32xf32>
    %175 = arith.addf %173, %174 : vector<8x32xf32>
    %176 = vector.extract_strided_slice %8 {offsets = [56, 0], sizes = [8, 128], strides = [1, 1]} : vector<64x128xf32> to vector<8x128xf32>
    %cst_36 = arith.constant dense<0.000000e+00> : vector<8x128xf32>
    %177 = tpu.matmul %175, %3, %cst_36 {dimension_numbers = #tpu.dot_dimension_numbers<[1], [0], [0], [1], [0, 0, 1, 1], [], []>} : vector<8x32xf32>, vector<32x128xf32>, vector<8x128xf32> -> vector<8x128xf32>
    %178 = vector.extract_strided_slice %176 {offsets = [0, 0], sizes = [8, 64], strides = [1, 1]} : vector<8x128xf32> to vector<8x64xf32>
    %179 = vector.extract_strided_slice %177 {offsets = [0, 0], sizes = [8, 64], strides = [1, 1]} : vector<8x128xf32> to vector<8x64xf32>
    %180 = arith.addf %178, %179 : vector<8x64xf32>
    %181 = arith.negf %180 : vector<8x64xf32>
    %182 = math.exp %181 : vector<8x64xf32>
    %cst_37 = arith.constant 1.000000e+00 : f32
    %183 = vector.broadcast %cst_37 : f32 to vector<8x64xf32>
    %184 = arith.addf %183, %182 : vector<8x64xf32>
    %185 = arith.divf %183, %184 : vector<8x64xf32>
    %186 = vector.extract_strided_slice %185 {offsets = [0, 0], sizes = [8, 32], strides = [1, 1]} : vector<8x64xf32> to vector<8x32xf32>
    %187 = vector.extract_strided_slice %185 {offsets = [0, 32], sizes = [8, 32], strides = [1, 1]} : vector<8x64xf32> to vector<8x32xf32>
    %188 = vector.extract_strided_slice %176 {offsets = [0, 64], sizes = [8, 32], strides = [1, 1]} : vector<8x128xf32> to vector<8x32xf32>
    %189 = vector.extract_strided_slice %177 {offsets = [0, 64], sizes = [8, 32], strides = [1, 1]} : vector<8x128xf32> to vector<8x32xf32>
    %190 = arith.addf %189, %12 : vector<8x32xf32>
    %191 = arith.mulf %186, %190 : vector<8x32xf32>
    %192 = arith.addf %188, %191 : vector<8x32xf32>
    %193 = math.tanh %192 : vector<8x32xf32>
    %cst_38 = arith.constant 1.000000e+00 : f32
    %194 = vector.broadcast %cst_38 : f32 to vector<8x32xf32>
    %195 = arith.subf %194, %187 : vector<8x32xf32>
    %196 = arith.mulf %195, %193 : vector<8x32xf32>
    %197 = arith.mulf %187, %175 : vector<8x32xf32>
    %198 = arith.addf %196, %197 : vector<8x32xf32>
    %c0_39 = arith.constant 0 : index
    %c0_40 = arith.constant 0 : index
    %c0_41 = arith.constant 0 : index
    %199 = vector.load %arg11[%c0_39, %c0_40, %c0_41] : memref<2x8x32xf32, #tpu.memory_space<vmem>>, vector<1x8x32xf32>
    %200 = vector.shape_cast %199 : vector<1x8x32xf32> to vector<8x32xf32>
    %201 = vector.shape_cast %198 : vector<8x32xf32> to vector<1x8x32xf32>
    tpu.vector_store %arg11[%c0_39, %c0_40, %c0_41], %201 {strides = array<i32>} : memref<2x8x32xf32, #tpu.memory_space<vmem>>, vector<1x8x32xf32>,
    %202 = tpu.concatenate %37, %60, %83, %106, %129, %152, %175, %198 in 0 : vector<8x32xf32>, vector<8x32xf32>, vector<8x32xf32>, vector<8x32xf32>, vector<8x32xf32>, vector<8x32xf32>, vector<8x32xf32>, vector<8x32xf32> -> vector<64x32xf32>
    %c0_42 = arith.constant 0 : index
    %c0_43 = arith.constant 0 : index
    %c0_44 = arith.constant 0 : index
    %203 = vector.load %arg4[%c0_42, %c0_43, %c0_44] : memref<1x32x128xf32, #tpu.memory_space<vmem>>, vector<1x32x128xf32>
    %204 = vector.shape_cast %203 : vector<1x32x128xf32> to vector<32x128xf32>
    %c1 = arith.constant 1 : index
    %c0_45 = arith.constant 0 : index
    %c0_46 = arith.constant 0 : index
    %205 = vector.load %arg5[%c1, %c0_45, %c0_46] : memref<2x32x128xf32, #tpu.memory_space<vmem>>, vector<1x32x128xf32>
    %206 = vector.shape_cast %205 : vector<1x32x128xf32> to vector<32x128xf32>
    %cst_47 = arith.constant dense<0.000000e+00> : vector<64x128xf32>
    %207 = tpu.matmul %202, %204, %cst_47 {dimension_numbers = #tpu.dot_dimension_numbers<[1], [0], [0], [1], [0, 0, 1, 1], [], []>} : vector<64x32xf32>, vector<32x128xf32>, vector<64x128xf32> -> vector<64x128xf32>
    %c1_48 = arith.constant 1 : index
    %c0_49 = arith.constant 0 : index
    %c0_50 = arith.constant 0 : index
    %208 = vector.load %arg6[%c1_48, %c0_49, %c0_50] : memref<2x1x128xf32, #tpu.memory_space<vmem>>, vector<1x1x128xf32>
    %209 = vector.shape_cast %208 : vector<1x1x128xf32> to vector<1x128xf32>
    %210 = vector.broadcast %209 : vector<1x128xf32> to vector<64x128xf32>
    %211 = arith.addf %207, %210 : vector<64x128xf32>
    %c1_51 = arith.constant 1 : index
    %c0_52 = arith.constant 0 : index
    %c0_53 = arith.constant 0 : index
    %212 = vector.load %arg7[%c1_51, %c0_52, %c0_53] : memref<2x1x32xf32, #tpu.memory_space<vmem>>, vector<1x1x32xf32>
    %213 = vector.shape_cast %212 : vector<1x1x32xf32> to vector<1x32xf32>
    %214 = vector.shape_cast %213 : vector<1x32xf32> to vector<1x32xf32>
    %215 = vector.broadcast %214 : vector<1x32xf32> to vector<8x32xf32>
    %c1_54 = arith.constant 1 : index
    %c0_55 = arith.constant 0 : index
    %c0_56 = arith.constant 0 : index
    %216 = vector.load %arg2[%c1_54, %c0_55, %c0_56] : memref<2x8x32xf32, #tpu.memory_space<vmem>>, vector<1x8x32xf32>
    %217 = vector.shape_cast %216 : vector<1x8x32xf32> to vector<8x32xf32>
    %218 = vector.extract_strided_slice %211 {offsets = [0, 0], sizes = [8, 128], strides = [1, 1]} : vector<64x128xf32> to vector<8x128xf32>
    %cst_57 = arith.constant dense<0.000000e+00> : vector<8x128xf32>
    %219 = tpu.matmul %217, %206, %cst_57 {dimension_numbers = #tpu.dot_dimension_numbers<[1], [0], [0], [1], [0, 0, 1, 1], [], []>} : vector<8x32xf32>, vector<32x128xf32>, vector<8x128xf32> -> vector<8x128xf32>
    %220 = vector.extract_strided_slice %218 {offsets = [0, 0], sizes = [8, 64], strides = [1, 1]} : vector<8x128xf32> to vector<8x64xf32>
    %221 = vector.extract_strided_slice %219 {offsets = [0, 0], sizes = [8, 64], strides = [1, 1]} : vector<8x128xf32> to vector<8x64xf32>
    %222 = arith.addf %220, %221 : vector<8x64xf32>
    %223 = arith.negf %222 : vector<8x64xf32>
    %224 = math.exp %223 : vector<8x64xf32>
    %cst_58 = arith.constant 1.000000e+00 : f32
    %225 = vector.broadcast %cst_58 : f32 to vector<8x64xf32>
    %226 = arith.addf %225, %224 : vector<8x64xf32>
    %227 = arith.divf %225, %226 : vector<8x64xf32>
    %228 = vector.extract_strided_slice %227 {offsets = [0, 0], sizes = [8, 32], strides = [1, 1]} : vector<8x64xf32> to vector<8x32xf32>
    %229 = vector.extract_strided_slice %227 {offsets = [0, 32], sizes = [8, 32], strides = [1, 1]} : vector<8x64xf32> to vector<8x32xf32>
    %230 = vector.extract_strided_slice %218 {offsets = [0, 64], sizes = [8, 32], strides = [1, 1]} : vector<8x128xf32> to vector<8x32xf32>
    %231 = vector.extract_strided_slice %219 {offsets = [0, 64], sizes = [8, 32], strides = [1, 1]} : vector<8x128xf32> to vector<8x32xf32>
    %232 = arith.addf %231, %215 : vector<8x32xf32>
    %233 = arith.mulf %228, %232 : vector<8x32xf32>
    %234 = arith.addf %230, %233 : vector<8x32xf32>
    %235 = math.tanh %234 : vector<8x32xf32>
    %cst_59 = arith.constant 1.000000e+00 : f32
    %236 = vector.broadcast %cst_59 : f32 to vector<8x32xf32>
    %237 = arith.subf %236, %229 : vector<8x32xf32>
    %238 = arith.mulf %237, %235 : vector<8x32xf32>
    %239 = arith.mulf %229, %217 : vector<8x32xf32>
    %240 = arith.addf %238, %239 : vector<8x32xf32>
    %241 = vector.extract_strided_slice %211 {offsets = [8, 0], sizes = [8, 128], strides = [1, 1]} : vector<64x128xf32> to vector<8x128xf32>
    %cst_60 = arith.constant dense<0.000000e+00> : vector<8x128xf32>
    %242 = tpu.matmul %240, %206, %cst_60 {dimension_numbers = #tpu.dot_dimension_numbers<[1], [0], [0], [1], [0, 0, 1, 1], [], []>} : vector<8x32xf32>, vector<32x128xf32>, vector<8x128xf32> -> vector<8x128xf32>
    %243 = vector.extract_strided_slice %241 {offsets = [0, 0], sizes = [8, 64], strides = [1, 1]} : vector<8x128xf32> to vector<8x64xf32>
    %244 = vector.extract_strided_slice %242 {offsets = [0, 0], sizes = [8, 64], strides = [1, 1]} : vector<8x128xf32> to vector<8x64xf32>
    %245 = arith.addf %243, %244 : vector<8x64xf32>
    %246 = arith.negf %245 : vector<8x64xf32>
    %247 = math.exp %246 : vector<8x64xf32>
    %cst_61 = arith.constant 1.000000e+00 : f32
    %248 = vector.broadcast %cst_61 : f32 to vector<8x64xf32>
    %249 = arith.addf %248, %247 : vector<8x64xf32>
    %250 = arith.divf %248, %249 : vector<8x64xf32>
    %251 = vector.extract_strided_slice %250 {offsets = [0, 0], sizes = [8, 32], strides = [1, 1]} : vector<8x64xf32> to vector<8x32xf32>
    %252 = vector.extract_strided_slice %250 {offsets = [0, 32], sizes = [8, 32], strides = [1, 1]} : vector<8x64xf32> to vector<8x32xf32>
    %253 = vector.extract_strided_slice %241 {offsets = [0, 64], sizes = [8, 32], strides = [1, 1]} : vector<8x128xf32> to vector<8x32xf32>
    %254 = vector.extract_strided_slice %242 {offsets = [0, 64], sizes = [8, 32], strides = [1, 1]} : vector<8x128xf32> to vector<8x32xf32>
    %255 = arith.addf %254, %215 : vector<8x32xf32>
    %256 = arith.mulf %251, %255 : vector<8x32xf32>
    %257 = arith.addf %253, %256 : vector<8x32xf32>
    %258 = math.tanh %257 : vector<8x32xf32>
    %cst_62 = arith.constant 1.000000e+00 : f32
    %259 = vector.broadcast %cst_62 : f32 to vector<8x32xf32>
    %260 = arith.subf %259, %252 : vector<8x32xf32>
    %261 = arith.mulf %260, %258 : vector<8x32xf32>
    %262 = arith.mulf %252, %240 : vector<8x32xf32>
    %263 = arith.addf %261, %262 : vector<8x32xf32>
    %264 = vector.extract_strided_slice %211 {offsets = [16, 0], sizes = [8, 128], strides = [1, 1]} : vector<64x128xf32> to vector<8x128xf32>
    %cst_63 = arith.constant dense<0.000000e+00> : vector<8x128xf32>
    %265 = tpu.matmul %263, %206, %cst_63 {dimension_numbers = #tpu.dot_dimension_numbers<[1], [0], [0], [1], [0, 0, 1, 1], [], []>} : vector<8x32xf32>, vector<32x128xf32>, vector<8x128xf32> -> vector<8x128xf32>
    %266 = vector.extract_strided_slice %264 {offsets = [0, 0], sizes = [8, 64], strides = [1, 1]} : vector<8x128xf32> to vector<8x64xf32>
    %267 = vector.extract_strided_slice %265 {offsets = [0, 0], sizes = [8, 64], strides = [1, 1]} : vector<8x128xf32> to vector<8x64xf32>
    %268 = arith.addf %266, %267 : vector<8x64xf32>
    %269 = arith.negf %268 : vector<8x64xf32>
    %270 = math.exp %269 : vector<8x64xf32>
    %cst_64 = arith.constant 1.000000e+00 : f32
    %271 = vector.broadcast %cst_64 : f32 to vector<8x64xf32>
    %272 = arith.addf %271, %270 : vector<8x64xf32>
    %273 = arith.divf %271, %272 : vector<8x64xf32>
    %274 = vector.extract_strided_slice %273 {offsets = [0, 0], sizes = [8, 32], strides = [1, 1]} : vector<8x64xf32> to vector<8x32xf32>
    %275 = vector.extract_strided_slice %273 {offsets = [0, 32], sizes = [8, 32], strides = [1, 1]} : vector<8x64xf32> to vector<8x32xf32>
    %276 = vector.extract_strided_slice %264 {offsets = [0, 64], sizes = [8, 32], strides = [1, 1]} : vector<8x128xf32> to vector<8x32xf32>
    %277 = vector.extract_strided_slice %265 {offsets = [0, 64], sizes = [8, 32], strides = [1, 1]} : vector<8x128xf32> to vector<8x32xf32>
    %278 = arith.addf %277, %215 : vector<8x32xf32>
    %279 = arith.mulf %274, %278 : vector<8x32xf32>
    %280 = arith.addf %276, %279 : vector<8x32xf32>
    %281 = math.tanh %280 : vector<8x32xf32>
    %cst_65 = arith.constant 1.000000e+00 : f32
    %282 = vector.broadcast %cst_65 : f32 to vector<8x32xf32>
    %283 = arith.subf %282, %275 : vector<8x32xf32>
    %284 = arith.mulf %283, %281 : vector<8x32xf32>
    %285 = arith.mulf %275, %263 : vector<8x32xf32>
    %286 = arith.addf %284, %285 : vector<8x32xf32>
    %287 = vector.extract_strided_slice %211 {offsets = [24, 0], sizes = [8, 128], strides = [1, 1]} : vector<64x128xf32> to vector<8x128xf32>
    %cst_66 = arith.constant dense<0.000000e+00> : vector<8x128xf32>
    %288 = tpu.matmul %286, %206, %cst_66 {dimension_numbers = #tpu.dot_dimension_numbers<[1], [0], [0], [1], [0, 0, 1, 1], [], []>} : vector<8x32xf32>, vector<32x128xf32>, vector<8x128xf32> -> vector<8x128xf32>
    %289 = vector.extract_strided_slice %287 {offsets = [0, 0], sizes = [8, 64], strides = [1, 1]} : vector<8x128xf32> to vector<8x64xf32>
    %290 = vector.extract_strided_slice %288 {offsets = [0, 0], sizes = [8, 64], strides = [1, 1]} : vector<8x128xf32> to vector<8x64xf32>
    %291 = arith.addf %289, %290 : vector<8x64xf32>
    %292 = arith.negf %291 : vector<8x64xf32>
    %293 = math.exp %292 : vector<8x64xf32>
    %cst_67 = arith.constant 1.000000e+00 : f32
    %294 = vector.broadcast %cst_67 : f32 to vector<8x64xf32>
    %295 = arith.addf %294, %293 : vector<8x64xf32>
    %296 = arith.divf %294, %295 : vector<8x64xf32>
    %297 = vector.extract_strided_slice %296 {offsets = [0, 0], sizes = [8, 32], strides = [1, 1]} : vector<8x64xf32> to vector<8x32xf32>
    %298 = vector.extract_strided_slice %296 {offsets = [0, 32], sizes = [8, 32], strides = [1, 1]} : vector<8x64xf32> to vector<8x32xf32>
    %299 = vector.extract_strided_slice %287 {offsets = [0, 64], sizes = [8, 32], strides = [1, 1]} : vector<8x128xf32> to vector<8x32xf32>
    %300 = vector.extract_strided_slice %288 {offsets = [0, 64], sizes = [8, 32], strides = [1, 1]} : vector<8x128xf32> to vector<8x32xf32>
    %301 = arith.addf %300, %215 : vector<8x32xf32>
    %302 = arith.mulf %297, %301 : vector<8x32xf32>
    %303 = arith.addf %299, %302 : vector<8x32xf32>
    %304 = math.tanh %303 : vector<8x32xf32>
    %cst_68 = arith.constant 1.000000e+00 : f32
    %305 = vector.broadcast %cst_68 : f32 to vector<8x32xf32>
    %306 = arith.subf %305, %298 : vector<8x32xf32>
    %307 = arith.mulf %306, %304 : vector<8x32xf32>
    %308 = arith.mulf %298, %286 : vector<8x32xf32>
    %309 = arith.addf %307, %308 : vector<8x32xf32>
    %310 = vector.extract_strided_slice %211 {offsets = [32, 0], sizes = [8, 128], strides = [1, 1]} : vector<64x128xf32> to vector<8x128xf32>
    %cst_69 = arith.constant dense<0.000000e+00> : vector<8x128xf32>
    %311 = tpu.matmul %309, %206, %cst_69 {dimension_numbers = #tpu.dot_dimension_numbers<[1], [0], [0], [1], [0, 0, 1, 1], [], []>} : vector<8x32xf32>, vector<32x128xf32>, vector<8x128xf32> -> vector<8x128xf32>
    %312 = vector.extract_strided_slice %310 {offsets = [0, 0], sizes = [8, 64], strides = [1, 1]} : vector<8x128xf32> to vector<8x64xf32>
    %313 = vector.extract_strided_slice %311 {offsets = [0, 0], sizes = [8, 64], strides = [1, 1]} : vector<8x128xf32> to vector<8x64xf32>
    %314 = arith.addf %312, %313 : vector<8x64xf32>
    %315 = arith.negf %314 : vector<8x64xf32>
    %316 = math.exp %315 : vector<8x64xf32>
    %cst_70 = arith.constant 1.000000e+00 : f32
    %317 = vector.broadcast %cst_70 : f32 to vector<8x64xf32>
    %318 = arith.addf %317, %316 : vector<8x64xf32>
    %319 = arith.divf %317, %318 : vector<8x64xf32>
    %320 = vector.extract_strided_slice %319 {offsets = [0, 0], sizes = [8, 32], strides = [1, 1]} : vector<8x64xf32> to vector<8x32xf32>
    %321 = vector.extract_strided_slice %319 {offsets = [0, 32], sizes = [8, 32], strides = [1, 1]} : vector<8x64xf32> to vector<8x32xf32>
    %322 = vector.extract_strided_slice %310 {offsets = [0, 64], sizes = [8, 32], strides = [1, 1]} : vector<8x128xf32> to vector<8x32xf32>
    %323 = vector.extract_strided_slice %311 {offsets = [0, 64], sizes = [8, 32], strides = [1, 1]} : vector<8x128xf32> to vector<8x32xf32>
    %324 = arith.addf %323, %215 : vector<8x32xf32>
    %325 = arith.mulf %320, %324 : vector<8x32xf32>
    %326 = arith.addf %322, %325 : vector<8x32xf32>
    %327 = math.tanh %326 : vector<8x32xf32>
    %cst_71 = arith.constant 1.000000e+00 : f32
    %328 = vector.broadcast %cst_71 : f32 to vector<8x32xf32>
    %329 = arith.subf %328, %321 : vector<8x32xf32>
    %330 = arith.mulf %329, %327 : vector<8x32xf32>
    %331 = arith.mulf %321, %309 : vector<8x32xf32>
    %332 = arith.addf %330, %331 : vector<8x32xf32>
    %333 = vector.extract_strided_slice %211 {offsets = [40, 0], sizes = [8, 128], strides = [1, 1]} : vector<64x128xf32> to vector<8x128xf32>
    %cst_72 = arith.constant dense<0.000000e+00> : vector<8x128xf32>
    %334 = tpu.matmul %332, %206, %cst_72 {dimension_numbers = #tpu.dot_dimension_numbers<[1], [0], [0], [1], [0, 0, 1, 1], [], []>} : vector<8x32xf32>, vector<32x128xf32>, vector<8x128xf32> -> vector<8x128xf32>
    %335 = vector.extract_strided_slice %333 {offsets = [0, 0], sizes = [8, 64], strides = [1, 1]} : vector<8x128xf32> to vector<8x64xf32>
    %336 = vector.extract_strided_slice %334 {offsets = [0, 0], sizes = [8, 64], strides = [1, 1]} : vector<8x128xf32> to vector<8x64xf32>
    %337 = arith.addf %335, %336 : vector<8x64xf32>
    %338 = arith.negf %337 : vector<8x64xf32>
    %339 = math.exp %338 : vector<8x64xf32>
    %cst_73 = arith.constant 1.000000e+00 : f32
    %340 = vector.broadcast %cst_73 : f32 to vector<8x64xf32>
    %341 = arith.addf %340, %339 : vector<8x64xf32>
    %342 = arith.divf %340, %341 : vector<8x64xf32>
    %343 = vector.extract_strided_slice %342 {offsets = [0, 0], sizes = [8, 32], strides = [1, 1]} : vector<8x64xf32> to vector<8x32xf32>
    %344 = vector.extract_strided_slice %342 {offsets = [0, 32], sizes = [8, 32], strides = [1, 1]} : vector<8x64xf32> to vector<8x32xf32>
    %345 = vector.extract_strided_slice %333 {offsets = [0, 64], sizes = [8, 32], strides = [1, 1]} : vector<8x128xf32> to vector<8x32xf32>
    %346 = vector.extract_strided_slice %334 {offsets = [0, 64], sizes = [8, 32], strides = [1, 1]} : vector<8x128xf32> to vector<8x32xf32>
    %347 = arith.addf %346, %215 : vector<8x32xf32>
    %348 = arith.mulf %343, %347 : vector<8x32xf32>
    %349 = arith.addf %345, %348 : vector<8x32xf32>
    %350 = math.tanh %349 : vector<8x32xf32>
    %cst_74 = arith.constant 1.000000e+00 : f32
    %351 = vector.broadcast %cst_74 : f32 to vector<8x32xf32>
    %352 = arith.subf %351, %344 : vector<8x32xf32>
    %353 = arith.mulf %352, %350 : vector<8x32xf32>
    %354 = arith.mulf %344, %332 : vector<8x32xf32>
    %355 = arith.addf %353, %354 : vector<8x32xf32>
    %356 = vector.extract_strided_slice %211 {offsets = [48, 0], sizes = [8, 128], strides = [1, 1]} : vector<64x128xf32> to vector<8x128xf32>
    %cst_75 = arith.constant dense<0.000000e+00> : vector<8x128xf32>
    %357 = tpu.matmul %355, %206, %cst_75 {dimension_numbers = #tpu.dot_dimension_numbers<[1], [0], [0], [1], [0, 0, 1, 1], [], []>} : vector<8x32xf32>, vector<32x128xf32>, vector<8x128xf32> -> vector<8x128xf32>
    %358 = vector.extract_strided_slice %356 {offsets = [0, 0], sizes = [8, 64], strides = [1, 1]} : vector<8x128xf32> to vector<8x64xf32>
    %359 = vector.extract_strided_slice %357 {offsets = [0, 0], sizes = [8, 64], strides = [1, 1]} : vector<8x128xf32> to vector<8x64xf32>
    %360 = arith.addf %358, %359 : vector<8x64xf32>
    %361 = arith.negf %360 : vector<8x64xf32>
    %362 = math.exp %361 : vector<8x64xf32>
    %cst_76 = arith.constant 1.000000e+00 : f32
    %363 = vector.broadcast %cst_76 : f32 to vector<8x64xf32>
    %364 = arith.addf %363, %362 : vector<8x64xf32>
    %365 = arith.divf %363, %364 : vector<8x64xf32>
    %366 = vector.extract_strided_slice %365 {offsets = [0, 0], sizes = [8, 32], strides = [1, 1]} : vector<8x64xf32> to vector<8x32xf32>
    %367 = vector.extract_strided_slice %365 {offsets = [0, 32], sizes = [8, 32], strides = [1, 1]} : vector<8x64xf32> to vector<8x32xf32>
    %368 = vector.extract_strided_slice %356 {offsets = [0, 64], sizes = [8, 32], strides = [1, 1]} : vector<8x128xf32> to vector<8x32xf32>
    %369 = vector.extract_strided_slice %357 {offsets = [0, 64], sizes = [8, 32], strides = [1, 1]} : vector<8x128xf32> to vector<8x32xf32>
    %370 = arith.addf %369, %215 : vector<8x32xf32>
    %371 = arith.mulf %366, %370 : vector<8x32xf32>
    %372 = arith.addf %368, %371 : vector<8x32xf32>
    %373 = math.tanh %372 : vector<8x32xf32>
    %cst_77 = arith.constant 1.000000e+00 : f32
    %374 = vector.broadcast %cst_77 : f32 to vector<8x32xf32>
    %375 = arith.subf %374, %367 : vector<8x32xf32>
    %376 = arith.mulf %375, %373 : vector<8x32xf32>
    %377 = arith.mulf %367, %355 : vector<8x32xf32>
    %378 = arith.addf %376, %377 : vector<8x32xf32>
    %379 = vector.extract_strided_slice %211 {offsets = [56, 0], sizes = [8, 128], strides = [1, 1]} : vector<64x128xf32> to vector<8x128xf32>
    %cst_78 = arith.constant dense<0.000000e+00> : vector<8x128xf32>
    %380 = tpu.matmul %378, %206, %cst_78 {dimension_numbers = #tpu.dot_dimension_numbers<[1], [0], [0], [1], [0, 0, 1, 1], [], []>} : vector<8x32xf32>, vector<32x128xf32>, vector<8x128xf32> -> vector<8x128xf32>
    %381 = vector.extract_strided_slice %379 {offsets = [0, 0], sizes = [8, 64], strides = [1, 1]} : vector<8x128xf32> to vector<8x64xf32>
    %382 = vector.extract_strided_slice %380 {offsets = [0, 0], sizes = [8, 64], strides = [1, 1]} : vector<8x128xf32> to vector<8x64xf32>
    %383 = arith.addf %381, %382 : vector<8x64xf32>
    %384 = arith.negf %383 : vector<8x64xf32>
    %385 = math.exp %384 : vector<8x64xf32>
    %cst_79 = arith.constant 1.000000e+00 : f32
    %386 = vector.broadcast %cst_79 : f32 to vector<8x64xf32>
    %387 = arith.addf %386, %385 : vector<8x64xf32>
    %388 = arith.divf %386, %387 : vector<8x64xf32>
    %389 = vector.extract_strided_slice %388 {offsets = [0, 0], sizes = [8, 32], strides = [1, 1]} : vector<8x64xf32> to vector<8x32xf32>
    %390 = vector.extract_strided_slice %388 {offsets = [0, 32], sizes = [8, 32], strides = [1, 1]} : vector<8x64xf32> to vector<8x32xf32>
    %391 = vector.extract_strided_slice %379 {offsets = [0, 64], sizes = [8, 32], strides = [1, 1]} : vector<8x128xf32> to vector<8x32xf32>
    %392 = vector.extract_strided_slice %380 {offsets = [0, 64], sizes = [8, 32], strides = [1, 1]} : vector<8x128xf32> to vector<8x32xf32>
    %393 = arith.addf %392, %215 : vector<8x32xf32>
    %394 = arith.mulf %389, %393 : vector<8x32xf32>
    %395 = arith.addf %391, %394 : vector<8x32xf32>
    %396 = math.tanh %395 : vector<8x32xf32>
    %cst_80 = arith.constant 1.000000e+00 : f32
    %397 = vector.broadcast %cst_80 : f32 to vector<8x32xf32>
    %398 = arith.subf %397, %390 : vector<8x32xf32>
    %399 = arith.mulf %398, %396 : vector<8x32xf32>
    %400 = arith.mulf %390, %378 : vector<8x32xf32>
    %401 = arith.addf %399, %400 : vector<8x32xf32>
    %c1_81 = arith.constant 1 : index
    %c0_82 = arith.constant 0 : index
    %c0_83 = arith.constant 0 : index
    %402 = vector.load %arg11[%c1_81, %c0_82, %c0_83] : memref<2x8x32xf32, #tpu.memory_space<vmem>>, vector<1x8x32xf32>
    %403 = vector.shape_cast %402 : vector<1x8x32xf32> to vector<8x32xf32>
    %404 = vector.shape_cast %401 : vector<8x32xf32> to vector<1x8x32xf32>
    tpu.vector_store %arg11[%c1_81, %c0_82, %c0_83], %404 {strides = array<i32>} : memref<2x8x32xf32, #tpu.memory_space<vmem>>, vector<1x8x32xf32>,
    %405 = tpu.concatenate %240, %263, %286, %309, %332, %355, %378, %401 in 0 : vector<8x32xf32>, vector<8x32xf32>, vector<8x32xf32>, vector<8x32xf32>, vector<8x32xf32>, vector<8x32xf32>, vector<8x32xf32>, vector<8x32xf32> -> vector<64x32xf32>
    %c0_84 = arith.constant 0 : index
    %c0_85 = arith.constant 0 : index
    %406 = vector.load %arg8[%c0_84, %c0_85] : memref<32x128xf32, #tpu.memory_space<vmem>>, vector<32x128xf32>
    %cst_86 = arith.constant dense<0.000000e+00> : vector<64x128xf32>
    %407 = tpu.matmul %405, %406, %cst_86 {dimension_numbers = #tpu.dot_dimension_numbers<[1], [0], [0], [1], [0, 0, 1, 1], [], []>} : vector<64x32xf32>, vector<32x128xf32>, vector<64x128xf32> -> vector<64x128xf32>
    %c0_87 = arith.constant 0 : index
    %c0_88 = arith.constant 0 : index
    %408 = vector.load %arg9[%c0_87, %c0_88] : memref<1x128xf32, #tpu.memory_space<vmem>>, vector<1x128xf32>
    %409 = vector.broadcast %408 : vector<1x128xf32> to vector<64x128xf32>
    %410 = arith.addf %407, %409 : vector<64x128xf32>
    %c0_89 = arith.constant 0 : index
    %c0_90 = arith.constant 0 : index
    %411 = vector.load %arg10[%c0_89, %c0_90] : memref<64x128xf32, #tpu.memory_space<vmem>>, vector<64x128xf32>
    tpu.vector_store %arg10[%c0_89, %c0_90], %410 {strides = array<i32>} : memref<64x128xf32, #tpu.memory_space<vmem>>, vector<64x128xf32>,
    return
  }
  func.func @transform_0(%arg0: i32) -> (i32, i32) {
    %c0_i32 = arith.constant 0 : i32
    %c0_i32_0 = arith.constant 0 : i32
    %c0_i32_1 = arith.constant 0 : i32
    return %c0_i32, %c0_i32_0 : i32, i32
  }
  func.func @transform_1(%arg0: i32) -> (i32, i32, i32) {
    %c0_i32 = arith.constant 0 : i32
    %c0_i32_0 = arith.constant 0 : i32
    %c0_i32_1 = arith.constant 0 : i32
    %c0_i32_2 = arith.constant 0 : i32
    return %c0_i32, %c0_i32_0, %c0_i32_1 : i32, i32, i32
  }
  func.func @transform_2(%arg0: i32) -> (i32, i32) {
    %c0_i32 = arith.constant 0 : i32
    %c0_i32_0 = arith.constant 0 : i32
    %c0_i32_1 = arith.constant 0 : i32
    return %c0_i32, %c0_i32_0 : i32, i32
  }
  func.func @transform_3(%arg0: i32) -> (i32, i32, i32) {
    %c0_i32 = arith.constant 0 : i32
    %c0_i32_0 = arith.constant 0 : i32
    %c0_i32_1 = arith.constant 0 : i32
    %c0_i32_2 = arith.constant 0 : i32
    return %c0_i32, %c0_i32_0, %c0_i32_1 : i32, i32, i32
  }
  func.func @transform_4(%arg0: i32) -> (i32, i32, i32) {
    %c0_i32 = arith.constant 0 : i32
    %c0_i32_0 = arith.constant 0 : i32
    %c0_i32_1 = arith.constant 0 : i32
    %c0_i32_2 = arith.constant 0 : i32
    return %c0_i32, %c0_i32_0, %c0_i32_1 : i32, i32, i32
  }
  func.func @transform_5(%arg0: i32) -> (i32, i32, i32) {
    %c0_i32 = arith.constant 0 : i32
    %c0_i32_0 = arith.constant 0 : i32
    %c0_i32_1 = arith.constant 0 : i32
    %c0_i32_2 = arith.constant 0 : i32
    return %c0_i32, %c0_i32_0, %c0_i32_1 : i32, i32, i32
  }
  func.func @transform_6(%arg0: i32) -> (i32, i32, i32) {
    %c0_i32 = arith.constant 0 : i32
    %c0_i32_0 = arith.constant 0 : i32
    %c0_i32_1 = arith.constant 0 : i32
    %c0_i32_2 = arith.constant 0 : i32
    return %c0_i32, %c0_i32_0, %c0_i32_1 : i32, i32, i32
  }
  func.func @transform_7(%arg0: i32) -> (i32, i32) {
    %c0_i32 = arith.constant 0 : i32
    %c0_i32_0 = arith.constant 0 : i32
    %c0_i32_1 = arith.constant 0 : i32
    return %c0_i32, %c0_i32_0 : i32, i32
  }
  func.func @transform_8(%arg0: i32) -> (i32, i32) {
    %c0_i32 = arith.constant 0 : i32
    %c0_i32_0 = arith.constant 0 : i32
    %c0_i32_1 = arith.constant 0 : i32
    return %c0_i32, %c0_i32_0 : i32, i32
  }
  func.func @transform_9(%arg0: i32) -> (i32, i32) {
    %c0_i32 = arith.constant 0 : i32
    %c0_i32_0 = arith.constant 0 : i32
    %c0_i32_1 = arith.constant 0 : i32
    return %c0_i32, %c0_i32_0 : i32, i32
  }
  func.func @transform_10(%arg0: i32) -> (i32, i32, i32) {
    %c0_i32 = arith.constant 0 : i32
    %c0_i32_0 = arith.constant 0 : i32
    %c0_i32_1 = arith.constant 0 : i32
    %c0_i32_2 = arith.constant 0 : i32
    return %c0_i32, %c0_i32_0, %c0_i32_1 : i32, i32, i32
  }
}

</mosaic_0001>

<llo_original>
// kernel: tpu_custom_call.1
$region0: #{tpu_custom_call.1}
  #allocation0 [shape = 'u32[]', space=smem, size = 0x4, offset = 0x4, fixed_abs, tag = 'smem constant byte address 0x4 - core index']
  #allocation1 [shape = 'u32[144,128]{1,0:T(1,128)}', space=vmem, size = 0x12000, scoped, tag = 'internal scratch']
  %s0 = inlined_call_operand.vmem [shape: f32[64,16], index: 0, kind: input, shape index: {}]
  %s1 = inlined_call_operand.hbm [shape: f32[2,8,32], index: 1, kind: input, shape index: {}]
  %s2 = inlined_call_operand.hbm [shape: f32[16,128], index: 2, kind: input, shape index: {}]
  %s3 = inlined_call_operand.hbm [shape: f32[1,32,128], index: 3, kind: input, shape index: {}]
  %s4 = inlined_call_operand.vmem [shape: f32[2,32,128], index: 4, kind: input, shape index: {}]
  %s5 = inlined_call_operand.vmem [shape: f32[2,1,128], index: 5, kind: input, shape index: {}]
  %s6 = inlined_call_operand.vmem [shape: f32[2,1,32], index: 6, kind: input, shape index: {}]
  %s7 = inlined_call_operand.vmem [shape: f32[32,128], index: 7, kind: input, shape index: {}]
  %s8 = inlined_call_operand.vmem [shape: f32[1,128], index: 8, kind: input, shape index: {}]
  %s9 = inlined_call_operand.hbm [shape: f32[64,128], index: 9, kind: output, shape index: {0}]
  %s10 = inlined_call_operand.hbm [shape: f32[2,8,32], index: 10, kind: output, shape index: {1}]
  %11 = xla_tuple %s9, %s10
  %s12 = sld [smem:[#allocation0]]
  $region66: #{tpu_custom_call.1} parent=0
    _
  %s14 = ssub.s32 1, %s12
  %s15 = scalar_select 0, %s14, %s12
  $region1: #{tpu_custom_call.1} parent=0
    #allocation2 [shape = 'u8[8192]{0}', space=vmem, size = 0x2000, scoped, tag = 'input window, operand 1, single buffered']
    #allocation3 [shape = 's32[1]{0}', space=sflag, size = 0x4, scoped, tag = 'scoped memory for tpu_custom_call.1']
    #allocation4 [shape = 's32[1]{0}', space=sflag, size = 0x4, scoped, tag = 'scoped memory for tpu_custom_call.1']
    #allocation5 [shape = 'u8[8192]{0}', space=vmem, size = 0x2000, scoped, tag = 'input window, operand 2, single buffered']
    #allocation6 [shape = 's32[1]{0}', space=sflag, size = 0x4, scoped, tag = 'scoped memory for tpu_custom_call.1']
    #allocation7 [shape = 'u8[16384]{0}', space=vmem, size = 0x4000, scoped, tag = 'input window, operand 3, single buffered']
    #allocation8 [shape = 'u8[32768]{0}', space=vmem, size = 0x8000, scoped, tag = 'output window, operand 0, single buffered']
    #allocation9 [shape = 'u8[8192]{0}', space=vmem, size = 0x2000, scoped, tag = 'output window, operand 1, single buffered']
    #allocation10 [shape = 's32[1]{0}', space=sflag, size = 0x4, scoped, tag = 'scoped memory for tpu_custom_call.1']
    %16 = vsyncpa [#allocation3], 0
    %17 = vsyncpa [#allocation6], 0
    %18 = vsyncpa [#allocation4], 0
    %19 = vsyncpa [#allocation10], 0
    // Predicated region
    $region2: #{tpu_custom_call.1} parent=1 // pred_check
      _
    $region3: #{tpu_custom_call.1} parent=1 // pred_check_branch
      %21 = sbr.rel (0) target = $region5
    $region4: #{tpu_custom_call.1} parent=1 // pred_region
      _
    $region5: #{tpu_custom_call.1} parent=1 // pred_fallthru
      _
    // Predicated region
    $region6: #{tpu_custom_call.1} parent=1 // pred_check
      _
    $region7: #{tpu_custom_call.1} parent=1 // pred_check_branch
      %23 = sbr.rel (0) target = $region9
    $region8: #{tpu_custom_call.1} parent=1 // pred_region
      %s25 = ssub.s32 256, 256
      %26 = vsyncadd [#allocation3], %s25
      %s27 = sshll.u32 [#allocation2], 4
      %s28 = int_to_ptr.vmem [resolvable:$true] %s27
      %33 = dma.hbm_to_vmem [thread:$0]  %s1, 256, %s28, [#allocation3], 128, 128, 8
    $region9: #{tpu_custom_call.1} parent=1 // pred_fallthru
      _
    // Predicated region
    $region10: #{tpu_custom_call.1} parent=1 // pred_check
      _
    $region11: #{tpu_custom_call.1} parent=1 // pred_check_branch
      %35 = sbr.rel (0) target = $region13
    $region12: #{tpu_custom_call.1} parent=1 // pred_region
      %s37 = ssub.s32 256, 256
      %38 = vsyncadd [#allocation6], %s37
      %s39 = sshll.u32 [#allocation5], 4
      %s40 = int_to_ptr.vmem [resolvable:$true] %s39
      %45 = dma.hbm_to_vmem [thread:$0]  %s2, 256, %s40, [#allocation6], 128, 128, 8
    $region13: #{tpu_custom_call.1} parent=1 // pred_fallthru
      _
    // Predicated region
    $region14: #{tpu_custom_call.1} parent=1 // pred_check
      _
    $region15: #{tpu_custom_call.1} parent=1 // pred_check_branch
      %47 = sbr.rel (0) target = $region17
    $region16: #{tpu_custom_call.1} parent=1 // pred_region
      %s49 = ssub.s32 512, 512
      %50 = vsyncadd [#allocation6], %s49
      %s51 = sshll.u32 [#allocation7], 4
      %s52 = int_to_ptr.vmem [resolvable:$true] %s51
      %57 = dma.hbm_to_vmem [thread:$0]  %s3, 512, %s52, [#allocation6], 128, 128, 8
    $region17: #{tpu_custom_call.1} parent=1 // pred_fallthru
      _
    // Predicated region
    $region18: #{tpu_custom_call.1} parent=1 // pred_check
      _
    $region19: #{tpu_custom_call.1} parent=1 // pred_check_branch
      %59 = sbr.rel (0) target = $region21
    $region20: #{tpu_custom_call.1} parent=1 // pred_region
      _
    $region21: #{tpu_custom_call.1} parent=1 // pred_fallthru
      _
    // Predicated region
    $region22: #{tpu_custom_call.1} parent=1 // pred_check
      _
    $region23: #{tpu_custom_call.1} parent=1 // pred_check_branch
      %61 = sbr.rel (0) target = $region25
    $region24: #{tpu_custom_call.1} parent=1 // pred_region
      _
    $region25: #{tpu_custom_call.1} parent=1 // pred_fallthru
      _
    // Predicated region
    $region26: #{tpu_custom_call.1} parent=1 // pred_check
      _
    $region27: #{tpu_custom_call.1} parent=1 // pred_check_branch
      %63 = sbr.rel (0) target = $region29
    $region28: #{tpu_custom_call.1} parent=1 // pred_region
      _
    $region29: #{tpu_custom_call.1} parent=1 // pred_fallthru
      _
    // Predicated region
    $region30: #{tpu_custom_call.1} parent=1 // pred_check
      _
    $region31: #{tpu_custom_call.1} parent=1 // pred_check_branch
      %65 = sbr.rel (0) target = $region33
    $region32: #{tpu_custom_call.1} parent=1 // pred_region
      _
    $region33: #{tpu_custom_call.1} parent=1 // pred_fallthru
      _
    // Predicated region
    $region34: #{tpu_custom_call.1} parent=1 // pred_check
      _
    $region35: #{tpu_custom_call.1} parent=1 // pred_check_branch
      %67 = sbr.rel (0) target = $region37
    $region36: #{tpu_custom_call.1} parent=1 // pred_region
      _
    $region37: #{tpu_custom_call.1} parent=1 // pred_fallthru
      _
    // Predicated region
    $region38: #{tpu_custom_call.1} parent=1 // pred_check
      _
    $region39: #{tpu_custom_call.1} parent=1 // pred_check_branch
      %69 = sbr.rel (0) target = $region41
    $region40: #{tpu_custom_call.1} parent=1 // pred_region
      %70 = dma.done [#allocation3], 256
    $region41: #{tpu_custom_call.1} parent=1 // pred_fallthru
      _
    // Predicated region
    $region42: #{tpu_custom_call.1} parent=1 // pred_check
      _
    $region43: #{tpu_custom_call.1} parent=1 // pred_check_branch
      %72 = sbr.rel (0) target = $region45
    $region44: #{tpu_custom_call.1} parent=1 // pred_region
      %73 = dma.done [#allocation6], 256
    $region45: #{tpu_custom_call.1} parent=1 // pred_fallthru
      _
    // Predicated region
    $region46: #{tpu_custom_call.1} parent=1 // pred_check
      _
    $region47: #{tpu_custom_call.1} parent=1 // pred_check_branch
      %75 = sbr.rel (0) target = $region49
    $region48: #{tpu_custom_call.1} parent=1 // pred_region
      %76 = dma.done [#allocation6], 512
    $region49: #{tpu_custom_call.1} parent=1 // pred_fallthru
      _
    %v77 = vld [vmem:[%s0] sm:$0xff]
    %v78 = vld [vmem:[%s0 + $0x8] sm:$0xff]
    %v79 = vld [vmem:[%s0 + $0x10] sm:$0xff]
    %v80 = vld [vmem:[%s0 + $0x18] sm:$0xff]
    %v81 = vld [vmem:[%s0 + $0x20] sm:$0xff]
    %v82 = vld [vmem:[%s0 + $0x28] sm:$0xff]
    %v83 = vld [vmem:[%s0 + $0x30] sm:$0xff]
    %v84 = vld [vmem:[%s0 + $0x38] sm:$0xff]
    %v85 = vld [vmem:[#allocation5] sm:$0xff]
    %v86 = vld [vmem:[#allocation5 + $0x8] sm:$0xff]
    %v87 = vld [vmem:[%s4] sm:$0xff]
    %v88 = vld [vmem:[%s4 + $0x8] sm:$0xff]
    %v89 = vld [vmem:[%s4 + $0x10] sm:$0xff]
    %v90 = vld [vmem:[%s4 + $0x18] sm:$0xff]
    %v91 = vld [vmem:[%s5] sm:$0x1]
    %v93 = vlaneseq
    %v94 = vshrl.u32 %v93, 7
    %v95 = vsub.s32 0, %v94
    %v96 = vrot.slane %v91, %v95
    %vm98 = vcmask 130048
    %v100 = vsel %vm98, %v77, 0
    %v103 = vsel %vm98, %v78, 0
    %v106 = vsel %vm98, %v79, 0
    %v109 = vsel %vm98, %v80, 0
    %v112 = vsel %vm98, %v81, 0
    %v115 = vsel %vm98, %v82, 0
    %v118 = vsel %vm98, %v83, 0
    %v121 = vsel %vm98, %v84, 0
    %123 = vmatprep.subr.mxu0 0.0
    %124 = vmatpush1.msra.mxu0 %v85
    %125 = vmatprep.subr.mxu0 0.0
    %126 = vmatpush1.msra.mxu0 %v86
    %127 = vmatprep.subr.mxu0 0.0
    %128 = vmatpush1.msra.mxu0 0.0
    %129 = vmatprep.subr.mxu0 0.0
    %130 = vmatpush1.msra.mxu0 0.0
    %131 = vmatprep.subr.mxu0 0.0
    %132 = vmatpush1.msra.mxu0 0.0
    %133 = vmatprep.subr.mxu0 0.0
    %134 = vmatpush1.msra.mxu0 0.0
    %135 = vmatprep.subr.mxu0 0.0
    %136 = vmatpush1.msra.mxu0 0.0
    %137 = vmatprep.subr.mxu0 0.0
    %138 = vmatpush1.msra.mxu0 0.0
    %139 = vmatprep.subr.mxu0 0.0
    %140 = vmatpush1.msra.mxu0 0.0
    %141 = vmatprep.subr.mxu0 0.0
    %142 = vmatpush1.msra.mxu0 0.0
    %143 = vmatprep.subr.mxu0 0.0
    %144 = vmatpush1.msra.mxu0 0.0
    %145 = vmatprep.subr.mxu0 0.0
    %146 = vmatpush1.msra.mxu0 0.0
    %147 = vmatprep.subr.mxu0 0.0
    %148 = vmatpush1.msra.mxu0 0.0
    %149 = vmatprep.subr.mxu0 0.0
    %150 = vmatpush1.msra.mxu0 0.0
    %151 = vmatprep.subr.mxu0 0.0
    %152 = vmatpush1.msra.mxu0 0.0
    %153 = vmatprep.subr.mxu0 0.0
    %154 = vmatpush1.msra.mxu0 0.0
    %155 = vmatprep.subr.mxu0 0.0
    %156 = vmatpush1.msra.mxu0 0.0
    %157 = vmatprep.subr.mxu0 0.0
    %158 = vmatpush1.msra.mxu0 0.0
    %159 = vmatprep.subr.mxu0 0.0
    %160 = vmatpush1.msra.mxu0 0.0
    %161 = vmatprep.subr.mxu0 0.0
    %162 = vmatpush1.msra.mxu0 0.0
    %163 = vmatprep.subr.mxu0 0.0
    %164 = vmatpush1.msra.mxu0 0.0
    %165 = vmatprep.subr.mxu0 0.0
    %166 = vmatpush1.msra.mxu0 0.0
    %167 = vmatprep.subr.mxu0 0.0
    %168 = vmatpush1.msra.mxu0 0.0
    %169 = vmatprep.subr.mxu0 0.0
    %170 = vmatpush1.msra.mxu0 0.0
    %171 = vmatprep.subr.mxu0 0.0
    %172 = vmatpush1.msra.mxu0 0.0
    %173 = vmatprep.subr.mxu0 0.0
    %174 = vmatpush1.msra.mxu0 0.0
    %175 = vmatprep.subr.mxu0 0.0
    %176 = vmatpush1.msra.mxu0 0.0
    %177 = vmatprep.subr.mxu0 0.0
    %178 = vmatpush1.msra.mxu0 0.0
    %179 = vmatprep.subr.mxu0 0.0
    %180 = vmatpush1.msra.mxu0 0.0
    %181 = vmatprep.subr.mxu0 0.0
    %182 = vmatpush1.msra.mxu0 0.0
    %183 = vmatprep.subr.mxu0 0.0
    %184 = vmatpush1.msra.mxu0 0.0
    %185 = vmatprep.subr.mxu0 0.0
    %186 = vmatpush1.msra.mxu0 0.0
    %187 = vmatprep.mubr.f32.mxu0 0.0
    %188 = vmatmul.mubr.f32.gmra.mrb[0].mxu0 %v100
    %v189 = vpop.f32.mrb[0].mxu0
    %v190 = vadd.f32 %v96, %v189
    %v191 = vpop.f32.mrb[0].mxu0
    %192 = vmatprep.mubr.f32.mxu0 0.0
    %193 = vmatmul.mubr.f32.gmra.mrb[0].mxu0 %v103
    %v194 = vpop.f32.mrb[0].mxu0
    %v195 = vadd.f32 %v96, %v194
    %v196 = vpop.f32.mrb[0].mxu0
    %197 = vmatprep.mubr.f32.mxu0 0.0
    %198 = vmatmul.mubr.f32.gmra.mrb[0].mxu0 %v106
    %v199 = vpop.f32.mrb[0].mxu0
    %v200 = vadd.f32 %v96, %v199
    %v201 = vpop.f32.mrb[0].mxu0
    %202 = vmatprep.mubr.f32.mxu0 0.0
    %203 = vmatmul.mubr.f32.gmra.mrb[0].mxu0 %v109
    %v204 = vpop.f32.mrb[0].mxu0
    %v205 = vadd.f32 %v96, %v204
    %v206 = vpop.f32.mrb[0].mxu0
    %207 = vmatprep.mubr.f32.mxu0 0.0
    %208 = vmatmul.mubr.f32.gmra.mrb[0].mxu0 %v112
    %v209 = vpop.f32.mrb[0].mxu0
    %v210 = vadd.f32 %v96, %v209
    %v211 = vpop.f32.mrb[0].mxu0
    %212 = vmatprep.mubr.f32.mxu0 0.0
    %213 = vmatmul.mubr.f32.gmra.mrb[0].mxu0 %v115
    %v214 = vpop.f32.mrb[0].mxu0
    %v215 = vadd.f32 %v96, %v214
    %v216 = vpop.f32.mrb[0].mxu0
    %217 = vmatprep.mubr.f32.mxu0 0.0
    %218 = vmatmul.mubr.f32.gmra.mrb[0].mxu0 %v118
    %v219 = vpop.f32.mrb[0].mxu0
    %v220 = vadd.f32 %v96, %v219
    %v221 = vpop.f32.mrb[0].mxu0
    %222 = vmatprep.mubr.f32.mxu0 0.0
    %223 = vmatmul.mubr.f32.gmra.mrb[0].mxu0 %v121
    %v224 = vpop.f32.mrb[0].mxu0
    %v225 = vadd.f32 %v96, %v224
    %v226 = vpop.f32.mrb[0].mxu0
    %227 = vdwg.mxu0
    %v228 = vld [vmem:[%s6] sm:$0x1]
    %v230 = vlaneseq
    %v231 = vshrl.u32 %v230, 7
    %v232 = vsub.s32 0, %v231
    %v233 = vrot.slane %v228, %v232
    %v234 = vld [vmem:[#allocation2] sm:$0xff]
    %vm235 = vcmask 261120
    %v237 = vsel %vm235, %v234, 0
    %239 = vmatprep.subr.mxu0 0.0
    %240 = vmatpush1.msra.mxu0 %v87
    %241 = vmatprep.subr.mxu0 0.0
    %242 = vmatpush1.msra.mxu0 %v88
    %243 = vmatprep.subr.mxu0 0.0
    %244 = vmatpush1.msra.mxu0 %v89
    %245 = vmatprep.subr.mxu0 0.0
    %246 = vmatpush1.msra.mxu0 %v90
    %247 = vmatprep.subr.mxu0 0.0
    %248 = vmatpush1.msra.mxu0 0.0
    %249 = vmatprep.subr.mxu0 0.0
    %250 = vmatpush1.msra.mxu0 0.0
    %251 = vmatprep.subr.mxu0 0.0
    %252 = vmatpush1.msra.mxu0 0.0
    %253 = vmatprep.subr.mxu0 0.0
    %254 = vmatpush1.msra.mxu0 0.0
    %255 = vmatprep.subr.mxu0 0.0
    %256 = vmatpush1.msra.mxu0 0.0
    %257 = vmatprep.subr.mxu0 0.0
    %258 = vmatpush1.msra.mxu0 0.0
    %259 = vmatprep.subr.mxu0 0.0
    %260 = vmatpush1.msra.mxu0 0.0
    %261 = vmatprep.subr.mxu0 0.0
    %262 = vmatpush1.msra.mxu0 0.0
    %263 = vmatprep.subr.mxu0 0.0
    %264 = vmatpush1.msra.mxu0 0.0
    %265 = vmatprep.subr.mxu0 0.0
    %266 = vmatpush1.msra.mxu0 0.0
    %267 = vmatprep.subr.mxu0 0.0
    %268 = vmatpush1.msra.mxu0 0.0
    %269 = vmatprep.subr.mxu0 0.0
    %270 = vmatpush1.msra.mxu0 0.0
    %271 = vmatprep.subr.mxu0 0.0
    %272 = vmatpush1.msra.mxu0 0.0
    %273 = vmatprep.subr.mxu0 0.0
    %274 = vmatpush1.msra.mxu0 0.0
    %275 = vmatprep.subr.mxu0 0.0
    %276 = vmatpush1.msra.mxu0 0.0
    %277 = vmatprep.subr.mxu0 0.0
    %278 = vmatpush1.msra.mxu0 0.0
    %279 = vmatprep.subr.mxu0 0.0
    %280 = vmatpush1.msra.mxu0 0.0
    %281 = vmatprep.subr.mxu0 0.0
    %282 = vmatpush1.msra.mxu0 0.0
    %283 = vmatprep.subr.mxu0 0.0
    %284 = vmatpush1.msra.mxu0 0.0
    %285 = vmatprep.subr.mxu0 0.0
    %286 = vmatpush1.msra.mxu0 0.0
    %287 = vmatprep.subr.mxu0 0.0
    %288 = vmatpush1.msra.mxu0 0.0
    %289 = vmatprep.subr.mxu0 0.0
    %290 = vmatpush1.msra.mxu0 0.0
    %291 = vmatprep.subr.mxu0 0.0
    %292 = vmatpush1.msra.mxu0 0.0
    %293 = vmatprep.subr.mxu0 0.0
    %294 = vmatpush1.msra.mxu0 0.0
    %295 = vmatprep.subr.mxu0 0.0
    %296 = vmatpush1.msra.mxu0 0.0
    %297 = vmatprep.subr.mxu0 0.0
    %298 = vmatpush1.msra.mxu0 0.0
    %299 = vmatprep.subr.mxu0 0.0
    %300 = vmatpush1.msra.mxu0 0.0
    %301 = vmatprep.subr.mxu0 0.0
    %302 = vmatpush1.msra.mxu0 0.0
    %303 = vmatprep.mubr.f32.mxu0 0.0
    %304 = vmatmul.mubr.f32.gmra.mrb[0].mxu0 %v237
    %v305 = vpop.f32.mrb[0].mxu0
    %v306 = vadd.f32 0.0, %v305
    %v307 = vpop.f32.mrb[0].mxu0
    %308 = vdwg.mxu0
    %v309 = vadd.f32 %v190, %v306
    %v310 = vxor.u32 %v309, 2147483648
    %v311 = vmul.f32 %v310, 1.442695
    %v312 = vpow.pop %v311
    %v313 = vadd.f32 %v312, 1.0
    %v314 = vrcp.pop %v313
    %v315 = vmul.f32 1.0, %v314
    %316 = vrot.lane.b32.xlu0 %v233, 64
    %v317 = vpop.permute.xlu0 %316
    %v319 = vadd.f32 %v306, %v317
    %321 = vrot.lane.b32.xlu0 %v319, 64
    %v322 = vpop.permute.xlu0 %321
    %v324 = vmul.f32 %v315, %v322
    %326 = vrot.lane.b32.xlu0 %v324, 64
    %v327 = vpop.permute.xlu0 %326
    %v329 = vadd.f32 %v190, %v327
    %v330 = vtanh.pop %v329
    %v331 = vsub.f32 1.0, %v315
    %333 = vrot.lane.b32.xlu0 %v330, 96
    %v334 = vpop.permute.xlu0 %333
    %v336 = vmul.f32 %v331, %v334
    %337 = vrot.lane.b32.xlu0 %v234, 32
    %v338 = vpop.permute.xlu0 %337
    %v340 = vmul.f32 %v315, %v338
    %v341 = vadd.f32 %v336, %v340
    %343 = vrot.lane.b32.xlu0 %v341, 96
    %v344 = vpop.permute.xlu0 %343
    %v345 = vsel %vm235, %v344, 0
    %347 = vmatprep.subr.mxu0 0.0
    %348 = vmatpush1.msra.mxu0 %v87
    %349 = vmatprep.subr.mxu0 0.0
    %350 = vmatpush1.msra.mxu0 %v88
    %351 = vmatprep.subr.mxu0 0.0
    %352 = vmatpush1.msra.mxu0 %v89
    %353 = vmatprep.subr.mxu0 0.0
    %354 = vmatpush1.msra.mxu0 %v90
    %355 = vmatprep.subr.mxu0 0.0
    %356 = vmatpush1.msra.mxu0 0.0
    %357 = vmatprep.subr.mxu0 0.0
    %358 = vmatpush1.msra.mxu0 0.0
    %359 = vmatprep.subr.mxu0 0.0
    %360 = vmatpush1.msra.mxu0 0.0
    %361 = vmatprep.subr.mxu0 0.0
    %362 = vmatpush1.msra.mxu0 0.0
    %363 = vmatprep.subr.mxu0 0.0
    %364 = vmatpush1.msra.mxu0 0.0
    %365 = vmatprep.subr.mxu0 0.0
    %366 = vmatpush1.msra.mxu0 0.0
    %367 = vmatprep.subr.mxu0 0.0
    %368 = vmatpush1.msra.mxu0 0.0
    %369 = vmatprep.subr.mxu0 0.0
    %370 = vmatpush1.msra.mxu0 0.0
    %371 = vmatprep.subr.mxu0 0.0
    %372 = vmatpush1.msra.mxu0 0.0
    %373 = vmatprep.subr.mxu0 0.0
    %374 = vmatpush1.msra.mxu0 0.0
    %375 = vmatprep.subr.mxu0 0.0
    %376 = vmatpush1.msra.mxu0 0.0
    %377 = vmatprep.subr.mxu0 0.0
    %378 = vmatpush1.msra.mxu0 0.0
    %379 = vmatprep.subr.mxu0 0.0
    %380 = vmatpush1.msra.mxu0 0.0
    %381 = vmatprep.subr.mxu0 0.0
    %382 = vmatpush1.msra.mxu0 0.0
    %383 = vmatprep.subr.mxu0 0.0
    %384 = vmatpush1.msra.mxu0 0.0
    %385 = vmatprep.subr.mxu0 0.0
    %386 = vmatpush1.msra.mxu0 0.0
    %387 = vmatprep.subr.mxu0 0.0
    %388 = vmatpush1.msra.mxu0 0.0
    %389 = vmatprep.subr.mxu0 0.0
    %390 = vmatpush1.msra.mxu0 0.0
    %391 = vmatprep.subr.mxu0 0.0
    %392 = vmatpush1.msra.mxu0 0.0
    %393 = vmatprep.subr.mxu0 0.0
    %394 = vmatpush1.msra.mxu0 0.0
    %395 = vmatprep.subr.mxu0 0.0
    %396 = vmatpush1.msra.mxu0 0.0
    %397 = vmatprep.subr.mxu0 0.0
    %398 = vmatpush1.msra.mxu0 0.0
    %399 = vmatprep.subr.mxu0 0.0
    %400 = vmatpush1.msra.mxu0 0.0
    %401 = vmatprep.subr.mxu0 0.0
    %402 = vmatpush1.msra.mxu0 0.0
    %403 = vmatprep.subr.mxu0 0.0
    %404 = vmatpush1.msra.mxu0 0.0
    %405 = vmatprep.subr.mxu0 0.0
    %406 = vmatpush1.msra.mxu0 0.0
    %407 = vmatprep.subr.mxu0 0.0
    %408 = vmatpush1.msra.mxu0 0.0
    %409 = vmatprep.subr.mxu0 0.0
    %410 = vmatpush1.msra.mxu0 0.0
    %411 = vmatprep.mubr.f32.mxu0 0.0
    %412 = vmatmul.mubr.f32.gmra.mrb[0].mxu0 %v345
    %v413 = vpop.f32.mrb[0].mxu0
    %v414 = vadd.f32 0.0, %v413
    %v415 = vpop.f32.mrb[0].mxu0
    %416 = vdwg.mxu0
    %v417 = vadd.f32 %v195, %v414
    %v418 = vxor.u32 %v417, 2147483648
    %v419 = vmul.f32 %v418, 1.442695
    %v420 = vpow.pop %v419
    %v421 = vadd.f32 %v420, 1.0
    %v422 = vrcp.pop %v421
    %v423 = vmul.f32 1.0, %v422
    %v424 = vadd.f32 %v414, %v317
    %426 = vrot.lane.b32.xlu0 %v424, 64
    %v427 = vpop.permute.xlu0 %426
    %v429 = vmul.f32 %v423, %v427
    %431 = vrot.lane.b32.xlu0 %v429, 64
    %v432 = vpop.permute.xlu0 %431
    %v434 = vadd.f32 %v195, %v432
    %v435 = vtanh.pop %v434
    %v436 = vsub.f32 1.0, %v423
    %438 = vrot.lane.b32.xlu0 %v435, 96
    %v439 = vpop.permute.xlu0 %438
    %v441 = vmul.f32 %v436, %v439
    %v442 = vmul.f32 %v423, %v341
    %v443 = vadd.f32 %v441, %v442
    %445 = vrot.lane.b32.xlu0 %v443, 96
    %v446 = vpop.permute.xlu0 %445
    %v447 = vsel %vm235, %v446, 0
    %449 = vmatprep.subr.mxu0 0.0
    %450 = vmatpush1.msra.mxu0 %v87
    %451 = vmatprep.subr.mxu0 0.0
    %452 = vmatpush1.msra.mxu0 %v88
    %453 = vmatprep.subr.mxu0 0.0
    %454 = vmatpush1.msra.mxu0 %v89
    %455 = vmatprep.subr.mxu0 0.0
    %456 = vmatpush1.msra.mxu0 %v90
    %457 = vmatprep.subr.mxu0 0.0
    %458 = vmatpush1.msra.mxu0 0.0
    %459 = vmatprep.subr.mxu0 0.0
    %460 = vmatpush1.msra.mxu0 0.0
    %461 = vmatprep.subr.mxu0 0.0
    %462 = vmatpush1.msra.mxu0 0.0
    %463 = vmatprep.subr.mxu0 0.0
    %464 = vmatpush1.msra.mxu0 0.0
    %465 = vmatprep.subr.mxu0 0.0
    %466 = vmatpush1.msra.mxu0 0.0
    %467 = vmatprep.subr.mxu0 0.0
    %468 = vmatpush1.msra.mxu0 0.0
    %469 = vmatprep.subr.mxu0 0.0
    %470 = vmatpush1.msra.mxu0 0.0
    %471 = vmatprep.subr.mxu0 0.0
    %472 = vmatpush1.msra.mxu0 0.0
    %473 = vmatprep.subr.mxu0 0.0
    %474 = vmatpush1.msra.mxu0 0.0
    %475 = vmatprep.subr.mxu0 0.0
    %476 = vmatpush1.msra.mxu0 0.0
    %477 = vmatprep.subr.mxu0 0.0
    %478 = vmatpush1.msra.mxu0 0.0
    %479 = vmatprep.subr.mxu0 0.0
    %480 = vmatpush1.msra.mxu0 0.0
    %481 = vmatprep.subr.mxu0 0.0
    %482 = vmatpush1.msra.mxu0 0.0
    %483 = vmatprep.subr.mxu0 0.0
    %484 = vmatpush1.msra.mxu0 0.0
    %485 = vmatprep.subr.mxu0 0.0
    %486 = vmatpush1.msra.mxu0 0.0
    %487 = vmatprep.subr.mxu0 0.0
    %488 = vmatpush1.msra.mxu0 0.0
    %489 = vmatprep.subr.mxu0 0.0
    %490 = vmatpush1.msra.mxu0 0.0
    %491 = vmatprep.subr.mxu0 0.0
    %492 = vmatpush1.msra.mxu0 0.0
    %493 = vmatprep.subr.mxu0 0.0
    %494 = vmatpush1.msra.mxu0 0.0
    %495 = vmatprep.subr.mxu0 0.0
    %496 = vmatpush1.msra.mxu0 0.0
    %497 = vmatprep.subr.mxu0 0.0
    %498 = vmatpush1.msra.mxu0 0.0
    %499 = vmatprep.subr.mxu0 0.0
    %500 = vmatpush1.msra.mxu0 0.0
    %501 = vmatprep.subr.mxu0 0.0
    %502 = vmatpush1.msra.mxu0 0.0
    %503 = vmatprep.subr.mxu0 0.0
    %504 = vmatpush1.msra.mxu0 0.0
    %505 = vmatprep.subr.mxu0 0.0
    %506 = vmatpush1.msra.mxu0 0.0
    %507 = vmatprep.subr.mxu0 0.0
    %508 = vmatpush1.msra.mxu0 0.0
    %509 = vmatprep.subr.mxu0 0.0
    %510 = vmatpush1.msra.mxu0 0.0
    %511 = vmatprep.subr.mxu0 0.0
    %512 = vmatpush1.msra.mxu0 0.0
    %513 = vmatprep.mubr.f32.mxu0 0.0
    %514 = vmatmul.mubr.f32.gmra.mrb[0].mxu0 %v447
    %v515 = vpop.f32.mrb[0].mxu0
    %v516 = vadd.f32 0.0, %v515
    %v517 = vpop.f32.mrb[0].mxu0
    %518 = vdwg.mxu0
    %v519 = vadd.f32 %v200, %v516
    %v520 = vxor.u32 %v519, 2147483648
    %v521 = vmul.f32 %v520, 1.442695
    %v522 = vpow.pop %v521
    %v523 = vadd.f32 %v522, 1.0
    %v524 = vrcp.pop %v523
    %v525 = vmul.f32 1.0, %v524
    %v526 = vadd.f32 %v516, %v317
    %528 = vrot.lane.b32.xlu0 %v526, 64
    %v529 = vpop.permute.xlu0 %528
    %v531 = vmul.f32 %v525, %v529
    %533 = vrot.lane.b32.xlu0 %v531, 64
    %v534 = vpop.permute.xlu0 %533
    %v536 = vadd.f32 %v200, %v534
    %v537 = vtanh.pop %v536
    %v538 = vsub.f32 1.0, %v525
    %540 = vrot.lane.b32.xlu0 %v537, 96
    %v541 = vpop.permute.xlu0 %540
    %v543 = vmul.f32 %v538, %v541
    %v544 = vmul.f32 %v525, %v443
    %v545 = vadd.f32 %v543, %v544
    %547 = vrot.lane.b32.xlu0 %v545, 96
    %v548 = vpop.permute.xlu0 %547
    %v549 = vsel %vm235, %v548, 0
    %551 = vmatprep.subr.mxu0 0.0
    %552 = vmatpush1.msra.mxu0 %v87
    %553 = vmatprep.subr.mxu0 0.0
    %554 = vmatpush1.msra.mxu0 %v88
    %555 = vmatprep.subr.mxu0 0.0
    %556 = vmatpush1.msra.mxu0 %v89
    %557 = vmatprep.subr.mxu0 0.0
    %558 = vmatpush1.msra.mxu0 %v90
    %559 = vmatprep.subr.mxu0 0.0
    %560 = vmatpush1.msra.mxu0 0.0
    %561 = vmatprep.subr.mxu0 0.0
    %562 = vmatpush1.msra.mxu0 0.0
    %563 = vmatprep.subr.mxu0 0.0
    %564 = vmatpush1.msra.mxu0 0.0
    %565 = vmatprep.subr.mxu0 0.0
    %566 = vmatpush1.msra.mxu0 0.0
    %567 = vmatprep.subr.mxu0 0.0
    %568 = vmatpush1.msra.mxu0 0.0
    %569 = vmatprep.subr.mxu0 0.0
    %570 = vmatpush1.msra.mxu0 0.0
    %571 = vmatprep.subr.mxu0 0.0
    %572 = vmatpush1.msra.mxu0 0.0
    %573 = vmatprep.subr.mxu0 0.0
    %574 = vmatpush1.msra.mxu0 0.0
    %575 = vmatprep.subr.mxu0 0.0
    %576 = vmatpush1.msra.mxu0 0.0
    %577 = vmatprep.subr.mxu0 0.0
    %578 = vmatpush1.msra.mxu0 0.0
    %579 = vmatprep.subr.mxu0 0.0
    %580 = vmatpush1.msra.mxu0 0.0
    %581 = vmatprep.subr.mxu0 0.0
    %582 = vmatpush1.msra.mxu0 0.0
    %583 = vmatprep.subr.mxu0 0.0
    %584 = vmatpush1.msra.mxu0 0.0
    %585 = vmatprep.subr.mxu0 0.0
    %586 = vmatpush1.msra.mxu0 0.0
    %587 = vmatprep.subr.mxu0 0.0
    %588 = vmatpush1.msra.mxu0 0.0
    %589 = vmatprep.subr.mxu0 0.0
    %590 = vmatpush1.msra.mxu0 0.0
    %591 = vmatprep.subr.mxu0 0.0
    %592 = vmatpush1.msra.mxu0 0.0
    %593 = vmatprep.subr.mxu0 0.0
    %594 = vmatpush1.msra.mxu0 0.0
    %595 = vmatprep.subr.mxu0 0.0
    %596 = vmatpush1.msra.mxu0 0.0
    %597 = vmatprep.subr.mxu0 0.0
    %598 = vmatpush1.msra.mxu0 0.0
    %599 = vmatprep.subr.mxu0 0.0
    %600 = vmatpush1.msra.mxu0 0.0
    %601 = vmatprep.subr.mxu0 0.0
    %602 = vmatpush1.msra.mxu0 0.0
    %603 = vmatprep.subr.mxu0 0.0
    %604 = vmatpush1.msra.mxu0 0.0
    %605 = vmatprep.subr.mxu0 0.0
    %606 = vmatpush1.msra.mxu0 0.0
    %607 = vmatprep.subr.mxu0 0.0
    %608 = vmatpush1.msra.mxu0 0.0
    %609 = vmatprep.subr.mxu0 0.0
    %610 = vmatpush1.msra.mxu0 0.0
    %611 = vmatprep.subr.mxu0 0.0
    %612 = vmatpush1.msra.mxu0 0.0
    %613 = vmatprep.subr.mxu0 0.0
    %614 = vmatpush1.msra.mxu0 0.0
    %615 = vmatprep.mubr.f32.mxu0 0.0
    %616 = vmatmul.mubr.f32.gmra.mrb[0].mxu0 %v549
    %v617 = vpop.f32.mrb[0].mxu0
    %v618 = vadd.f32 0.0, %v617
    %v619 = vpop.f32.mrb[0].mxu0
    %620 = vdwg.mxu0
    %v621 = vadd.f32 %v205, %v618
    %v622 = vxor.u32 %v621, 2147483648
    %v623 = vmul.f32 %v622, 1.442695
    %v624 = vpow.pop %v623
    %v625 = vadd.f32 %v624, 1.0
    %v626 = vrcp.pop %v625
    %v627 = vmul.f32 1.0, %v626
    %v628 = vadd.f32 %v618, %v317
    %630 = vrot.lane.b32.xlu0 %v628, 64
    %v631 = vpop.permute.xlu0 %630
    %v633 = vmul.f32 %v627, %v631
    %635 = vrot.lane.b32.xlu0 %v633, 64
    %v636 = vpop.permute.xlu0 %635
    %v638 = vadd.f32 %v205, %v636
    %v639 = vtanh.pop %v638
    %v640 = vsub.f32 1.0, %v627
    %642 = vrot.lane.b32.xlu0 %v639, 96
    %v643 = vpop.permute.xlu0 %642
    %v645 = vmul.f32 %v640, %v643
    %v646 = vmul.f32 %v627, %v545
    %v647 = vadd.f32 %v645, %v646
    %649 = vrot.lane.b32.xlu0 %v647, 96
    %v650 = vpop.permute.xlu0 %649
    %v651 = vsel %vm235, %v650, 0
    %653 = vmatprep.subr.mxu0 0.0
    %654 = vmatpush1.msra.mxu0 %v87
    %655 = vmatprep.subr.mxu0 0.0
    %656 = vmatpush1.msra.mxu0 %v88
    %657 = vmatprep.subr.mxu0 0.0
    %658 = vmatpush1.msra.mxu0 %v89
    %659 = vmatprep.subr.mxu0 0.0
    %660 = vmatpush1.msra.mxu0 %v90
    %661 = vmatprep.subr.mxu0 0.0
    %662 = vmatpush1.msra.mxu0 0.0
    %663 = vmatprep.subr.mxu0 0.0
    %664 = vmatpush1.msra.mxu0 0.0
    %665 = vmatprep.subr.mxu0 0.0
    %666 = vmatpush1.msra.mxu0 0.0
    %667 = vmatprep.subr.mxu0 0.0
    %668 = vmatpush1.msra.mxu0 0.0
    %669 = vmatprep.subr.mxu0 0.0
    %670 = vmatpush1.msra.mxu0 0.0
    %671 = vmatprep.subr.mxu0 0.0
    %672 = vmatpush1.msra.mxu0 0.0
    %673 = vmatprep.subr.mxu0 0.0
    %674 = vmatpush1.msra.mxu0 0.0
    %675 = vmatprep.subr.mxu0 0.0
    %676 = vmatpush1.msra.mxu0 0.0
    %677 = vmatprep.subr.mxu0 0.0
    %678 = vmatpush1.msra.mxu0 0.0
    %679 = vmatprep.subr.mxu0 0.0
    %680 = vmatpush1.msra.mxu0 0.0
    %681 = vmatprep.subr.mxu0 0.0
    %682 = vmatpush1.msra.mxu0 0.0
    %683 = vmatprep.subr.mxu0 0.0
    %684 = vmatpush1.msra.mxu0 0.0
    %685 = vmatprep.subr.mxu0 0.0
    %686 = vmatpush1.msra.mxu0 0.0
    %687 = vmatprep.subr.mxu0 0.0
    %688 = vmatpush1.msra.mxu0 0.0
    %689 = vmatprep.subr.mxu0 0.0
    %690 = vmatpush1.msra.mxu0 0.0
    %691 = vmatprep.subr.mxu0 0.0
    %692 = vmatpush1.msra.mxu0 0.0
    %693 = vmatprep.subr.mxu0 0.0
    %694 = vmatpush1.msra.mxu0 0.0
    %695 = vmatprep.subr.mxu0 0.0
    %696 = vmatpush1.msra.mxu0 0.0
    %697 = vmatprep.subr.mxu0 0.0
    %698 = vmatpush1.msra.mxu0 0.0
    %699 = vmatprep.subr.mxu0 0.0
    %700 = vmatpush1.msra.mxu0 0.0
    %701 = vmatprep.subr.mxu0 0.0
    %702 = vmatpush1.msra.mxu0 0.0
    %703 = vmatprep.subr.mxu0 0.0
    %704 = vmatpush1.msra.mxu0 0.0
    %705 = vmatprep.subr.mxu0 0.0
    %706 = vmatpush1.msra.mxu0 0.0
    %707 = vmatprep.subr.mxu0 0.0
    %708 = vmatpush1.msra.mxu0 0.0
    %709 = vmatprep.subr.mxu0 0.0
    %710 = vmatpush1.msra.mxu0 0.0
    %711 = vmatprep.subr.mxu0 0.0
    %712 = vmatpush1.msra.mxu0 0.0
    %713 = vmatprep.subr.mxu0 0.0
    %714 = vmatpush1.msra.mxu0 0.0
    %715 = vmatprep.subr.mxu0 0.0
    %716 = vmatpush1.msra.mxu0 0.0
    %717 = vmatprep.mubr.f32.mxu0 0.0
    %718 = vmatmul.mubr.f32.gmra.mrb[0].mxu0 %v651
    %v719 = vpop.f32.mrb[0].mxu0
    %v720 = vadd.f32 0.0, %v719
    %v721 = vpop.f32.mrb[0].mxu0
    %722 = vdwg.mxu0
    %v723 = vadd.f32 %v210, %v720
    %v724 = vxor.u32 %v723, 2147483648
    %v725 = vmul.f32 %v724, 1.442695
    %v726 = vpow.pop %v725
    %v727 = vadd.f32 %v726, 1.0
    %v728 = vrcp.pop %v727
    %v729 = vmul.f32 1.0, %v728
    %v730 = vadd.f32 %v720, %v317
    %732 = vrot.lane.b32.xlu0 %v730, 64
    %v733 = vpop.permute.xlu0 %732
    %v735 = vmul.f32 %v729, %v733
    %737 = vrot.lane.b32.xlu0 %v735, 64
    %v738 = vpop.permute.xlu0 %737
    %v740 = vadd.f32 %v210, %v738
    %v741 = vtanh.pop %v740
    %v742 = vsub.f32 1.0, %v729
    %744 = vrot.lane.b32.xlu0 %v741, 96
    %v745 = vpop.permute.xlu0 %744
    %v747 = vmul.f32 %v742, %v745
    %v748 = vmul.f32 %v729, %v647
    %v749 = vadd.f32 %v747, %v748
    %751 = vrot.lane.b32.xlu0 %v749, 96
    %v752 = vpop.permute.xlu0 %751
    %v753 = vsel %vm235, %v752, 0
    %755 = vmatprep.subr.mxu0 0.0
    %756 = vmatpush1.msra.mxu0 %v87
    %757 = vmatprep.subr.mxu0 0.0
    %758 = vmatpush1.msra.mxu0 %v88
    %759 = vmatprep.subr.mxu0 0.0
    %760 = vmatpush1.msra.mxu0 %v89
    %761 = vmatprep.subr.mxu0 0.0
    %762 = vmatpush1.msra.mxu0 %v90
    %763 = vmatprep.subr.mxu0 0.0
    %764 = vmatpush1.msra.mxu0 0.0
    %765 = vmatprep.subr.mxu0 0.0
    %766 = vmatpush1.msra.mxu0 0.0
    %767 = vmatprep.subr.mxu0 0.0
    %768 = vmatpush1.msra.mxu0 0.0
    %769 = vmatprep.subr.mxu0 0.0
    %770 = vmatpush1.msra.mxu0 0.0
    %771 = vmatprep.subr.mxu0 0.0
    %772 = vmatpush1.msra.mxu0 0.0
    %773 = vmatprep.subr.mxu0 0.0
    %774 = vmatpush1.msra.mxu0 0.0
    %775 = vmatprep.subr.mxu0 0.0
    %776 = vmatpush1.msra.mxu0 0.0
    %777 = vmatprep.subr.mxu0 0.0
    %778 = vmatpush1.msra.mxu0 0.0
    %779 = vmatprep.subr.mxu0 0.0
    %780 = vmatpush1.msra.mxu0 0.0
    %781 = vmatprep.subr.mxu0 0.0
    %782 = vmatpush1.msra.mxu0 0.0
    %783 = vmatprep.subr.mxu0 0.0
    %784 = vmatpush1.msra.mxu0 0.0
    %785 = vmatprep.subr.mxu0 0.0
    %786 = vmatpush1.msra.mxu0 0.0
    %787 = vmatprep.subr.mxu0 0.0
    %788 = vmatpush1.msra.mxu0 0.0
    %789 = vmatprep.subr.mxu0 0.0
    %790 = vmatpush1.msra.mxu0 0.0
    %791 = vmatprep.subr.mxu0 0.0
    %792 = vmatpush1.msra.mxu0 0.0
    %793 = vmatprep.subr.mxu0 0.0
    %794 = vmatpush1.msra.mxu0 0.0
    %795 = vmatprep.subr.mxu0 0.0
    %796 = vmatpush1.msra.mxu0 0.0
    %797 = vmatprep.subr.mxu0 0.0
    %798 = vmatpush1.msra.mxu0 0.0
    %799 = vmatprep.subr.mxu0 0.0
    %800 = vmatpush1.msra.mxu0 0.0
    %801 = vmatprep.subr.mxu0 0.0
    %802 = vmatpush1.msra.mxu0 0.0
    %803 = vmatprep.subr.mxu0 0.0
    %804 = vmatpush1.msra.mxu0 0.0
    %805 = vmatprep.subr.mxu0 0.0
    %806 = vmatpush1.msra.mxu0 0.0
    %807 = vmatprep.subr.mxu0 0.0
    %808 = vmatpush1.msra.mxu0 0.0
    %809 = vmatprep.subr.mxu0 0.0
    %810 = vmatpush1.msra.mxu0 0.0
    %811 = vmatprep.subr.mxu0 0.0
    %812 = vmatpush1.msra.mxu0 0.0
    %813 = vmatprep.subr.mxu0 0.0
    %814 = vmatpush1.msra.mxu0 0.0
    %815 = vmatprep.subr.mxu0 0.0
    %816 = vmatpush1.msra.mxu0 0.0
    %817 = vmatprep.subr.mxu0 0.0
    %818 = vmatpush1.msra.mxu0 0.0
    %819 = vmatprep.mubr.f32.mxu0 0.0
    %820 = vmatmul.mubr.f32.gmra.mrb[0].mxu0 %v753
    %v821 = vpop.f32.mrb[0].mxu0
    %v822 = vadd.f32 0.0, %v821
    %v823 = vpop.f32.mrb[0].mxu0
    %824 = vdwg.mxu0
    %v825 = vadd.f32 %v215, %v822
    %v826 = vxor.u32 %v825, 2147483648
    %v827 = vmul.f32 %v826, 1.442695
    %v828 = vpow.pop %v827
    %v829 = vadd.f32 %v828, 1.0
    %v830 = vrcp.pop %v829
    %v831 = vmul.f32 1.0, %v830
    %v832 = vadd.f32 %v822, %v317
    %834 = vrot.lane.b32.xlu0 %v832, 64
    %v835 = vpop.permute.xlu0 %834
    %v837 = vmul.f32 %v831, %v835
    %839 = vrot.lane.b32.xlu0 %v837, 64
    %v840 = vpop.permute.xlu0 %839
    %v842 = vadd.f32 %v215, %v840
    %v843 = vtanh.pop %v842
    %v844 = vsub.f32 1.0, %v831
    %846 = vrot.lane.b32.xlu0 %v843, 96
    %v847 = vpop.permute.xlu0 %846
    %v849 = vmul.f32 %v844, %v847
    %v850 = vmul.f32 %v831, %v749
    %v851 = vadd.f32 %v849, %v850
    %853 = vrot.lane.b32.xlu0 %v851, 96
    %v854 = vpop.permute.xlu0 %853
    %v855 = vsel %vm235, %v854, 0
    %857 = vmatprep.subr.mxu0 0.0
    %858 = vmatpush1.msra.mxu0 %v87
    %859 = vmatprep.subr.mxu0 0.0
    %860 = vmatpush1.msra.mxu0 %v88
    %861 = vmatprep.subr.mxu0 0.0
    %862 = vmatpush1.msra.mxu0 %v89
    %863 = vmatprep.subr.mxu0 0.0
    %864 = vmatpush1.msra.mxu0 %v90
    %865 = vmatprep.subr.mxu0 0.0
    %866 = vmatpush1.msra.mxu0 0.0
    %867 = vmatprep.subr.mxu0 0.0
    %868 = vmatpush1.msra.mxu0 0.0
    %869 = vmatprep.subr.mxu0 0.0
    %870 = vmatpush1.msra.mxu0 0.0
    %871 = vmatprep.subr.mxu0 0.0
    %872 = vmatpush1.msra.mxu0 0.0
    %873 = vmatprep.subr.mxu0 0.0
    %874 = vmatpush1.msra.mxu0 0.0
    %875 = vmatprep.subr.mxu0 0.0
    %876 = vmatpush1.msra.mxu0 0.0
    %877 = vmatprep.subr.mxu0 0.0
    %878 = vmatpush1.msra.mxu0 0.0
    %879 = vmatprep.subr.mxu0 0.0
    %880 = vmatpush1.msra.mxu0 0.0
    %881 = vmatprep.subr.mxu0 0.0
    %882 = vmatpush1.msra.mxu0 0.0
    %883 = vmatprep.subr.mxu0 0.0
    %884 = vmatpush1.msra.mxu0 0.0
    %885 = vmatprep.subr.mxu0 0.0
    %886 = vmatpush1.msra.mxu0 0.0
    %887 = vmatprep.subr.mxu0 0.0
    %888 = vmatpush1.msra.mxu0 0.0
    %889 = vmatprep.subr.mxu0 0.0
    %890 = vmatpush1.msra.mxu0 0.0
    %891 = vmatprep.subr.mxu0 0.0
    %892 = vmatpush1.msra.mxu0 0.0
    %893 = vmatprep.subr.mxu0 0.0
    %894 = vmatpush1.msra.mxu0 0.0
    %895 = vmatprep.subr.mxu0 0.0
    %896 = vmatpush1.msra.mxu0 0.0
    %897 = vmatprep.subr.mxu0 0.0
    %898 = vmatpush1.msra.mxu0 0.0
    %899 = vmatprep.subr.mxu0 0.0
    %900 = vmatpush1.msra.mxu0 0.0
    %901 = vmatprep.subr.mxu0 0.0
    %902 = vmatpush1.msra.mxu0 0.0
    %903 = vmatprep.subr.mxu0 0.0
    %904 = vmatpush1.msra.mxu0 0.0
    %905 = vmatprep.subr.mxu0 0.0
    %906 = vmatpush1.msra.mxu0 0.0
    %907 = vmatprep.subr.mxu0 0.0
    %908 = vmatpush1.msra.mxu0 0.0
    %909 = vmatprep.subr.mxu0 0.0
    %910 = vmatpush1.msra.mxu0 0.0
    %911 = vmatprep.subr.mxu0 0.0
    %912 = vmatpush1.msra.mxu0 0.0
    %913 = vmatprep.subr.mxu0 0.0
    %914 = vmatpush1.msra.mxu0 0.0
    %915 = vmatprep.subr.mxu0 0.0
    %916 = vmatpush1.msra.mxu0 0.0
    %917 = vmatprep.subr.mxu0 0.0
    %918 = vmatpush1.msra.mxu0 0.0
    %919 = vmatprep.subr.mxu0 0.0
    %920 = vmatpush1.msra.mxu0 0.0
    %921 = vmatprep.mubr.f32.mxu0 0.0
    %922 = vmatmul.mubr.f32.gmra.mrb[0].mxu0 %v855
    %v923 = vpop.f32.mrb[0].mxu0
    %v924 = vadd.f32 0.0, %v923
    %v925 = vpop.f32.mrb[0].mxu0
    %926 = vdwg.mxu0
    %v927 = vadd.f32 %v220, %v924
    %v928 = vxor.u32 %v927, 2147483648
    %v929 = vmul.f32 %v928, 1.442695
    %v930 = vpow.pop %v929
    %v931 = vadd.f32 %v930, 1.0
    %v932 = vrcp.pop %v931
    %v933 = vmul.f32 1.0, %v932
    %v934 = vadd.f32 %v924, %v317
    %936 = vrot.lane.b32.xlu0 %v934, 64
    %v937 = vpop.permute.xlu0 %936
    %v939 = vmul.f32 %v933, %v937
    %941 = vrot.lane.b32.xlu0 %v939, 64
    %v942 = vpop.permute.xlu0 %941
    %v944 = vadd.f32 %v220, %v942
    %v945 = vtanh.pop %v944
    %v946 = vsub.f32 1.0, %v933
    %948 = vrot.lane.b32.xlu0 %v945, 96
    %v949 = vpop.permute.xlu0 %948
    %v951 = vmul.f32 %v946, %v949
    %v952 = vmul.f32 %v933, %v851
    %v953 = vadd.f32 %v951, %v952
    %955 = vrot.lane.b32.xlu0 %v953, 96
    %v956 = vpop.permute.xlu0 %955
    %v957 = vsel %vm235, %v956, 0
    %959 = vmatprep.subr.mxu0 0.0
    %960 = vmatpush1.msra.mxu0 %v87
    %961 = vmatprep.subr.mxu0 0.0
    %962 = vmatpush1.msra.mxu0 %v88
    %963 = vmatprep.subr.mxu0 0.0
    %964 = vmatpush1.msra.mxu0 %v89
    %965 = vmatprep.subr.mxu0 0.0
    %966 = vmatpush1.msra.mxu0 %v90
    %967 = vmatprep.subr.mxu0 0.0
    %968 = vmatpush1.msra.mxu0 0.0
    %969 = vmatprep.subr.mxu0 0.0
    %970 = vmatpush1.msra.mxu0 0.0
    %971 = vmatprep.subr.mxu0 0.0
    %972 = vmatpush1.msra.mxu0 0.0
    %973 = vmatprep.subr.mxu0 0.0
    %974 = vmatpush1.msra.mxu0 0.0
    %975 = vmatprep.subr.mxu0 0.0
    %976 = vmatpush1.msra.mxu0 0.0
    %977 = vmatprep.subr.mxu0 0.0
    %978 = vmatpush1.msra.mxu0 0.0
    %979 = vmatprep.subr.mxu0 0.0
    %980 = vmatpush1.msra.mxu0 0.0
    %981 = vmatprep.subr.mxu0 0.0
    %982 = vmatpush1.msra.mxu0 0.0
    %983 = vmatprep.subr.mxu0 0.0
    %984 = vmatpush1.msra.mxu0 0.0
    %985 = vmatprep.subr.mxu0 0.0
    %986 = vmatpush1.msra.mxu0 0.0
    %987 = vmatprep.subr.mxu0 0.0
    %988 = vmatpush1.msra.mxu0 0.0
    %989 = vmatprep.subr.mxu0 0.0
    %990 = vmatpush1.msra.mxu0 0.0
    %991 = vmatprep.subr.mxu0 0.0
    %992 = vmatpush1.msra.mxu0 0.0
    %993 = vmatprep.subr.mxu0 0.0
    %994 = vmatpush1.msra.mxu0 0.0
    %995 = vmatprep.subr.mxu0 0.0
    %996 = vmatpush1.msra.mxu0 0.0
    %997 = vmatprep.subr.mxu0 0.0
    %998 = vmatpush1.msra.mxu0 0.0
    %999 = vmatprep.subr.mxu0 0.0
    %1000 = vmatpush1.msra.mxu0 0.0
    %1001 = vmatprep.subr.mxu0 0.0
    %1002 = vmatpush1.msra.mxu0 0.0
    %1003 = vmatprep.subr.mxu0 0.0
    %1004 = vmatpush1.msra.mxu0 0.0
    %1005 = vmatprep.subr.mxu0 0.0
    %1006 = vmatpush1.msra.mxu0 0.0
    %1007 = vmatprep.subr.mxu0 0.0
    %1008 = vmatpush1.msra.mxu0 0.0
    %1009 = vmatprep.subr.mxu0 0.0
    %1010 = vmatpush1.msra.mxu0 0.0
    %1011 = vmatprep.subr.mxu0 0.0
    %1012 = vmatpush1.msra.mxu0 0.0
    %1013 = vmatprep.subr.mxu0 0.0
    %1014 = vmatpush1.msra.mxu0 0.0
    %1015 = vmatprep.subr.mxu0 0.0
    %1016 = vmatpush1.msra.mxu0 0.0
    %1017 = vmatprep.subr.mxu0 0.0
    %1018 = vmatpush1.msra.mxu0 0.0
    %1019 = vmatprep.subr.mxu0 0.0
    %1020 = vmatpush1.msra.mxu0 0.0
    %1021 = vmatprep.subr.mxu0 0.0
    %1022 = vmatpush1.msra.mxu0 0.0
    %1023 = vmatprep.mubr.f32.mxu0 0.0
    %1024 = vmatmul.mubr.f32.gmra.mrb[0].mxu0 %v957
    %v1025 = vpop.f32.mrb[0].mxu0
    %v1026 = vadd.f32 0.0, %v1025
    %v1027 = vpop.f32.mrb[0].mxu0
    %1028 = vdwg.mxu0
    %v1029 = vadd.f32 %v225, %v1026
    %v1030 = vxor.u32 %v1029, 2147483648
    %v1031 = vmul.f32 %v1030, 1.442695
    %v1032 = vpow.pop %v1031
    %v1033 = vadd.f32 %v1032, 1.0
    %v1034 = vrcp.pop %v1033
    %v1035 = vmul.f32 1.0, %v1034
    %v1036 = vadd.f32 %v1026, %v317
    %1038 = vrot.lane.b32.xlu0 %v1036, 64
    %v1039 = vpop.permute.xlu0 %1038
    %v1041 = vmul.f32 %v1035, %v1039
    %1043 = vrot.lane.b32.xlu0 %v1041, 64
    %v1044 = vpop.permute.xlu0 %1043
    %v1046 = vadd.f32 %v225, %v1044
    %v1047 = vtanh.pop %v1046
    %v1048 = vsub.f32 1.0, %v1035
    %1050 = vrot.lane.b32.xlu0 %v1047, 96
    %v1051 = vpop.permute.xlu0 %1050
    %v1053 = vmul.f32 %v1048, %v1051
    %v1054 = vmul.f32 %v1035, %v953
    %v1055 = vadd.f32 %v1053, %v1054
    %1057 = vrot.lane.b32.xlu0 %v1055, 96
    %v1058 = vpop.permute.xlu0 %1057
    %1060 = vst.msk [vmem:[#allocation9] sm:$0xff] %vm235, %v1058
    %v1061 = vld [vmem:[#allocation7] sm:$0xff]
    %v1062 = vld [vmem:[#allocation7 + $0x8] sm:$0xff]
    %v1063 = vld [vmem:[#allocation7 + $0x10] sm:$0xff]
    %v1064 = vld [vmem:[#allocation7 + $0x18] sm:$0xff]
    %s1065 = scalar_lea.vmem %s4, 32
    %v1066 = vld [vmem:[%s1065] sm:$0xff]
    %v1067 = vld [vmem:[%s1065 + $0x8] sm:$0xff]
    %v1068 = vld [vmem:[%s1065 + $0x10] sm:$0xff]
    %v1069 = vld [vmem:[%s1065 + $0x18] sm:$0xff]
    %s1070 = scalar_lea.vmem %s5, 1
    %v1071 = vld [vmem:[%s1070] sm:$0x1]
    %v1073 = vlaneseq
    %v1074 = vshrl.u32 %v1073, 7
    %v1075 = vsub.s32 0, %v1074
    %v1076 = vrot.slane %v1071, %v1075
    %v1078 = vsel %vm235, %v1058, 0
    %1080 = vmatprep.subr.mxu0 0.0
    %1081 = vmatpush1.msra.mxu0 %v1061
    %1082 = vmatprep.subr.mxu0 0.0
    %1083 = vmatpush1.msra.mxu0 %v1062
    %1084 = vmatprep.subr.mxu0 0.0
    %1085 = vmatpush1.msra.mxu0 %v1063
    %1086 = vmatprep.subr.mxu0 0.0
    %1087 = vmatpush1.msra.mxu0 %v1064
    %1088 = vmatprep.subr.mxu0 0.0
    %1089 = vmatpush1.msra.mxu0 0.0
    %1090 = vmatprep.subr.mxu0 0.0
    %1091 = vmatpush1.msra.mxu0 0.0
    %1092 = vmatprep.subr.mxu0 0.0
    %1093 = vmatpush1.msra.mxu0 0.0
    %1094 = vmatprep.subr.mxu0 0.0
    %1095 = vmatpush1.msra.mxu0 0.0
    %1096 = vmatprep.subr.mxu0 0.0
    %1097 = vmatpush1.msra.mxu0 0.0
    %1098 = vmatprep.subr.mxu0 0.0
    %1099 = vmatpush1.msra.mxu0 0.0
    %1100 = vmatprep.subr.mxu0 0.0
    %1101 = vmatpush1.msra.mxu0 0.0
    %1102 = vmatprep.subr.mxu0 0.0
    %1103 = vmatpush1.msra.mxu0 0.0
    %1104 = vmatprep.subr.mxu0 0.0
    %1105 = vmatpush1.msra.mxu0 0.0
    %1106 = vmatprep.subr.mxu0 0.0
    %1107 = vmatpush1.msra.mxu0 0.0
    %1108 = vmatprep.subr.mxu0 0.0
    %1109 = vmatpush1.msra.mxu0 0.0
    %1110 = vmatprep.subr.mxu0 0.0
    %1111 = vmatpush1.msra.mxu0 0.0
    %1112 = vmatprep.subr.mxu0 0.0
    %1113 = vmatpush1.msra.mxu0 0.0
    %1114 = vmatprep.subr.mxu0 0.0
    %1115 = vmatpush1.msra.mxu0 0.0
    %1116 = vmatprep.subr.mxu0 0.0
    %1117 = vmatpush1.msra.mxu0 0.0
    %1118 = vmatprep.subr.mxu0 0.0
    %1119 = vmatpush1.msra.mxu0 0.0
    %1120 = vmatprep.subr.mxu0 0.0
    %1121 = vmatpush1.msra.mxu0 0.0
    %1122 = vmatprep.subr.mxu0 0.0
    %1123 = vmatpush1.msra.mxu0 0.0
    %1124 = vmatprep.subr.mxu0 0.0
    %1125 = vmatpush1.msra.mxu0 0.0
    %1126 = vmatprep.subr.mxu0 0.0
    %1127 = vmatpush1.msra.mxu0 0.0
    %1128 = vmatprep.subr.mxu0 0.0
    %1129 = vmatpush1.msra.mxu0 0.0
    %1130 = vmatprep.subr.mxu0 0.0
    %1131 = vmatpush1.msra.mxu0 0.0
    %1132 = vmatprep.subr.mxu0 0.0
    %1133 = vmatpush1.msra.mxu0 0.0
    %1134 = vmatprep.subr.mxu0 0.0
    %1135 = vmatpush1.msra.mxu0 0.0
    %1136 = vmatprep.subr.mxu0 0.0
    %1137 = vmatpush1.msra.mxu0 0.0
    %1138 = vmatprep.subr.mxu0 0.0
    %1139 = vmatpush1.msra.mxu0 0.0
    %1140 = vmatprep.subr.mxu0 0.0
    %1141 = vmatpush1.msra.mxu0 0.0
    %1142 = vmatprep.subr.mxu0 0.0
    %1143 = vmatpush1.msra.mxu0 0.0
    %1144 = vmatprep.mubr.f32.mxu0 0.0
    %1145 = vmatmul.mubr.f32.gmra.mrb[0].mxu0 %v345
    %v1146 = vpop.f32.mrb[0].mxu0
    %v1147 = vadd.f32 %v1076, %v1146
    %v1148 = vpop.f32.mrb[0].mxu0
    %1149 = vmatprep.mubr.f32.mxu0 0.0
    %1150 = vmatmul.mubr.f32.gmra.mrb[0].mxu0 %v447
    %v1151 = vpop.f32.mrb[0].mxu0
    %v1152 = vadd.f32 %v1076, %v1151
    %v1153 = vpop.f32.mrb[0].mxu0
    %1154 = vmatprep.mubr.f32.mxu0 0.0
    %1155 = vmatmul.mubr.f32.gmra.mrb[0].mxu0 %v549
    %v1156 = vpop.f32.mrb[0].mxu0
    %v1157 = vadd.f32 %v1076, %v1156
    %v1158 = vpop.f32.mrb[0].mxu0
    %1159 = vmatprep.mubr.f32.mxu0 0.0
    %1160 = vmatmul.mubr.f32.gmra.mrb[0].mxu0 %v651
    %v1161 = vpop.f32.mrb[0].mxu0
    %v1162 = vadd.f32 %v1076, %v1161
    %v1163 = vpop.f32.mrb[0].mxu0
    %1164 = vmatprep.mubr.f32.mxu0 0.0
    %1165 = vmatmul.mubr.f32.gmra.mrb[0].mxu0 %v753
    %v1166 = vpop.f32.mrb[0].mxu0
    %v1167 = vadd.f32 %v1076, %v1166
    %v1168 = vpop.f32.mrb[0].mxu0
    %1169 = vmatprep.mubr.f32.mxu0 0.0
    %1170 = vmatmul.mubr.f32.gmra.mrb[0].mxu0 %v855
    %v1171 = vpop.f32.mrb[0].mxu0
    %v1172 = vadd.f32 %v1076, %v1171
    %v1173 = vpop.f32.mrb[0].mxu0
    %1174 = vmatprep.mubr.f32.mxu0 0.0
    %1175 = vmatmul.mubr.f32.gmra.mrb[0].mxu0 %v957
    %v1176 = vpop.f32.mrb[0].mxu0
    %v1177 = vadd.f32 %v1076, %v1176
    %v1178 = vpop.f32.mrb[0].mxu0
    %1179 = vmatprep.mubr.f32.mxu0 0.0
    %1180 = vmatmul.mubr.f32.gmra.mrb[0].mxu0 %v1078
    %v1181 = vpop.f32.mrb[0].mxu0
    %v1182 = vadd.f32 %v1076, %v1181
    %v1183 = vpop.f32.mrb[0].mxu0
    %1184 = vdwg.mxu0
    %s1185 = scalar_lea.vmem %s6, 1
    %v1186 = vld [vmem:[%s1185] sm:$0x1]
    %v1188 = vlaneseq
    %v1189 = vshrl.u32 %v1188, 7
    %v1190 = vsub.s32 0, %v1189
    %v1191 = vrot.slane %v1186, %v1190
    %s1192 = scalar_lea.vmem [#allocation2], 8
    %v1193 = vld [vmem:[%s1192] sm:$0xff]
    %v1195 = vsel %vm235, %v1193, 0
    %1197 = vmatprep.subr.mxu0 0.0
    %1198 = vmatpush1.msra.mxu0 %v1066
    %1199 = vmatprep.subr.mxu0 0.0
    %1200 = vmatpush1.msra.mxu0 %v1067
    %1201 = vmatprep.subr.mxu0 0.0
    %1202 = vmatpush1.msra.mxu0 %v1068
    %1203 = vmatprep.subr.mxu0 0.0
    %1204 = vmatpush1.msra.mxu0 %v1069
    %1205 = vmatprep.subr.mxu0 0.0
    %1206 = vmatpush1.msra.mxu0 0.0
    %1207 = vmatprep.subr.mxu0 0.0
    %1208 = vmatpush1.msra.mxu0 0.0
    %1209 = vmatprep.subr.mxu0 0.0
    %1210 = vmatpush1.msra.mxu0 0.0
    %1211 = vmatprep.subr.mxu0 0.0
    %1212 = vmatpush1.msra.mxu0 0.0
    %1213 = vmatprep.subr.mxu0 0.0
    %1214 = vmatpush1.msra.mxu0 0.0
    %1215 = vmatprep.subr.mxu0 0.0
    %1216 = vmatpush1.msra.mxu0 0.0
    %1217 = vmatprep.subr.mxu0 0.0
    %1218 = vmatpush1.msra.mxu0 0.0
    %1219 = vmatprep.subr.mxu0 0.0
    %1220 = vmatpush1.msra.mxu0 0.0
    %1221 = vmatprep.subr.mxu0 0.0
    %1222 = vmatpush1.msra.mxu0 0.0
    %1223 = vmatprep.subr.mxu0 0.0
    %1224 = vmatpush1.msra.mxu0 0.0
    %1225 = vmatprep.subr.mxu0 0.0
    %1226 = vmatpush1.msra.mxu0 0.0
    %1227 = vmatprep.subr.mxu0 0.0
    %1228 = vmatpush1.msra.mxu0 0.0
    %1229 = vmatprep.subr.mxu0 0.0
    %1230 = vmatpush1.msra.mxu0 0.0
    %1231 = vmatprep.subr.mxu0 0.0
    %1232 = vmatpush1.msra.mxu0 0.0
    %1233 = vmatprep.subr.mxu0 0.0
    %1234 = vmatpush1.msra.mxu0 0.0
    %1235 = vmatprep.subr.mxu0 0.0
    %1236 = vmatpush1.msra.mxu0 0.0
    %1237 = vmatprep.subr.mxu0 0.0
    %1238 = vmatpush1.msra.mxu0 0.0
    %1239 = vmatprep.subr.mxu0 0.0
    %1240 = vmatpush1.msra.mxu0 0.0
    %1241 = vmatprep.subr.mxu0 0.0
    %1242 = vmatpush1.msra.mxu0 0.0
    %1243 = vmatprep.subr.mxu0 0.0
    %1244 = vmatpush1.msra.mxu0 0.0
    %1245 = vmatprep.subr.mxu0 0.0
    %1246 = vmatpush1.msra.mxu0 0.0
    %1247 = vmatprep.subr.mxu0 0.0
    %1248 = vmatpush1.msra.mxu0 0.0
    %1249 = vmatprep.subr.mxu0 0.0
    %1250 = vmatpush1.msra.mxu0 0.0
    %1251 = vmatprep.subr.mxu0 0.0
    %1252 = vmatpush1.msra.mxu0 0.0
    %1253 = vmatprep.subr.mxu0 0.0
    %1254 = vmatpush1.msra.mxu0 0.0
    %1255 = vmatprep.subr.mxu0 0.0
    %1256 = vmatpush1.msra.mxu0 0.0
    %1257 = vmatprep.subr.mxu0 0.0
    %1258 = vmatpush1.msra.mxu0 0.0
    %1259 = vmatprep.subr.mxu0 0.0
    %1260 = vmatpush1.msra.mxu0 0.0
    %1261 = vmatprep.mubr.f32.mxu0 0.0
    %1262 = vmatmul.mubr.f32.gmra.mrb[0].mxu0 %v1195
    %v1263 = vpop.f32.mrb[0].mxu0
    %v1264 = vadd.f32 0.0, %v1263
    %v1265 = vpop.f32.mrb[0].mxu0
    %1266 = vdwg.mxu0
    %v1267 = vadd.f32 %v1147, %v1264
    %v1268 = vxor.u32 %v1267, 2147483648
    %v1269 = vmul.f32 %v1268, 1.442695
    %v1270 = vpow.pop %v1269
    %v1271 = vadd.f32 %v1270, 1.0
    %v1272 = vrcp.pop %v1271
    %v1273 = vmul.f32 1.0, %v1272
    %1274 = vrot.lane.b32.xlu0 %v1191, 64
    %v1275 = vpop.permute.xlu0 %1274
    %v1277 = vadd.f32 %v1264, %v1275
    %1279 = vrot.lane.b32.xlu0 %v1277, 64
    %v1280 = vpop.permute.xlu0 %1279
    %v1282 = vmul.f32 %v1273, %v1280
    %1284 = vrot.lane.b32.xlu0 %v1282, 64
    %v1285 = vpop.permute.xlu0 %1284
    %v1287 = vadd.f32 %v1147, %v1285
    %v1288 = vtanh.pop %v1287
    %v1289 = vsub.f32 1.0, %v1273
    %1291 = vrot.lane.b32.xlu0 %v1288, 96
    %v1292 = vpop.permute.xlu0 %1291
    %v1294 = vmul.f32 %v1289, %v1292
    %1295 = vrot.lane.b32.xlu0 %v1193, 32
    %v1296 = vpop.permute.xlu0 %1295
    %v1298 = vmul.f32 %v1273, %v1296
    %v1299 = vadd.f32 %v1294, %v1298
    %1301 = vrot.lane.b32.xlu0 %v1299, 96
    %v1302 = vpop.permute.xlu0 %1301
    %v1303 = vsel %vm235, %v1302, 0
    %1305 = vmatprep.subr.mxu0 0.0
    %1306 = vmatpush1.msra.mxu0 %v1066
    %1307 = vmatprep.subr.mxu0 0.0
    %1308 = vmatpush1.msra.mxu0 %v1067
    %1309 = vmatprep.subr.mxu0 0.0
    %1310 = vmatpush1.msra.mxu0 %v1068
    %1311 = vmatprep.subr.mxu0 0.0
    %1312 = vmatpush1.msra.mxu0 %v1069
    %1313 = vmatprep.subr.mxu0 0.0
    %1314 = vmatpush1.msra.mxu0 0.0
    %1315 = vmatprep.subr.mxu0 0.0
    %1316 = vmatpush1.msra.mxu0 0.0
    %1317 = vmatprep.subr.mxu0 0.0
    %1318 = vmatpush1.msra.mxu0 0.0
    %1319 = vmatprep.subr.mxu0 0.0
    %1320 = vmatpush1.msra.mxu0 0.0
    %1321 = vmatprep.subr.mxu0 0.0
    %1322 = vmatpush1.msra.mxu0 0.0
    %1323 = vmatprep.subr.mxu0 0.0
    %1324 = vmatpush1.msra.mxu0 0.0
    %1325 = vmatprep.subr.mxu0 0.0
    %1326 = vmatpush1.msra.mxu0 0.0
    %1327 = vmatprep.subr.mxu0 0.0
    %1328 = vmatpush1.msra.mxu0 0.0
    %1329 = vmatprep.subr.mxu0 0.0
    %1330 = vmatpush1.msra.mxu0 0.0
    %1331 = vmatprep.subr.mxu0 0.0
    %1332 = vmatpush1.msra.mxu0 0.0
    %1333 = vmatprep.subr.mxu0 0.0
    %1334 = vmatpush1.msra.mxu0 0.0
    %1335 = vmatprep.subr.mxu0 0.0
    %1336 = vmatpush1.msra.mxu0 0.0
    %1337 = vmatprep.subr.mxu0 0.0
    %1338 = vmatpush1.msra.mxu0 0.0
    %1339 = vmatprep.subr.mxu0 0.0
    %1340 = vmatpush1.msra.mxu0 0.0
    %1341 = vmatprep.subr.mxu0 0.0
    %1342 = vmatpush1.msra.mxu0 0.0
    %1343 = vmatprep.subr.mxu0 0.0
    %1344 = vmatpush1.msra.mxu0 0.0
    %1345 = vmatprep.subr.mxu0 0.0
    %1346 = vmatpush1.msra.mxu0 0.0
    %1347 = vmatprep.subr.mxu0 0.0
    %1348 = vmatpush1.msra.mxu0 0.0
    %1349 = vmatprep.subr.mxu0 0.0
    %1350 = vmatpush1.msra.mxu0 0.0
    %1351 = vmatprep.subr.mxu0 0.0
    %1352 = vmatpush1.msra.mxu0 0.0
    %1353 = vmatprep.subr.mxu0 0.0
    %1354 = vmatpush1.msra.mxu0 0.0
    %1355 = vmatprep.subr.mxu0 0.0
    %1356 = vmatpush1.msra.mxu0 0.0
    %1357 = vmatprep.subr.mxu0 0.0
    %1358 = vmatpush1.msra.mxu0 0.0
    %1359 = vmatprep.subr.mxu0 0.0
    %1360 = vmatpush1.msra.mxu0 0.0
    %1361 = vmatprep.subr.mxu0 0.0
    %1362 = vmatpush1.msra.mxu0 0.0
    %1363 = vmatprep.subr.mxu0 0.0
    %1364 = vmatpush1.msra.mxu0 0.0
    %1365 = vmatprep.subr.mxu0 0.0
    %1366 = vmatpush1.msra.mxu0 0.0
    %1367 = vmatprep.subr.mxu0 0.0
    %1368 = vmatpush1.msra.mxu0 0.0
    %1369 = vmatprep.mubr.f32.mxu0 0.0
    %1370 = vmatmul.mubr.f32.gmra.mrb[0].mxu0 %v1303
    %v1371 = vpop.f32.mrb[0].mxu0
    %v1372 = vadd.f32 0.0, %v1371
    %v1373 = vpop.f32.mrb[0].mxu0
    %1374 = vdwg.mxu0
    %v1375 = vadd.f32 %v1152, %v1372
    %v1376 = vxor.u32 %v1375, 2147483648
    %v1377 = vmul.f32 %v1376, 1.442695
    %v1378 = vpow.pop %v1377
    %v1379 = vadd.f32 %v1378, 1.0
    %v1380 = vrcp.pop %v1379
    %v1381 = vmul.f32 1.0, %v1380
    %v1382 = vadd.f32 %v1372, %v1275
    %1384 = vrot.lane.b32.xlu0 %v1382, 64
    %v1385 = vpop.permute.xlu0 %1384
    %v1387 = vmul.f32 %v1381, %v1385
    %1389 = vrot.lane.b32.xlu0 %v1387, 64
    %v1390 = vpop.permute.xlu0 %1389
    %v1392 = vadd.f32 %v1152, %v1390
    %v1393 = vtanh.pop %v1392
    %v1394 = vsub.f32 1.0, %v1381
    %1396 = vrot.lane.b32.xlu0 %v1393, 96
    %v1397 = vpop.permute.xlu0 %1396
    %v1399 = vmul.f32 %v1394, %v1397
    %v1400 = vmul.f32 %v1381, %v1299
    %v1401 = vadd.f32 %v1399, %v1400
    %1403 = vrot.lane.b32.xlu0 %v1401, 96
    %v1404 = vpop.permute.xlu0 %1403
    %v1405 = vsel %vm235, %v1404, 0
    %1407 = vmatprep.subr.mxu0 0.0
    %1408 = vmatpush1.msra.mxu0 %v1066
    %1409 = vmatprep.subr.mxu0 0.0
    %1410 = vmatpush1.msra.mxu0 %v1067
    %1411 = vmatprep.subr.mxu0 0.0
    %1412 = vmatpush1.msra.mxu0 %v1068
    %1413 = vmatprep.subr.mxu0 0.0
    %1414 = vmatpush1.msra.mxu0 %v1069
    %1415 = vmatprep.subr.mxu0 0.0
    %1416 = vmatpush1.msra.mxu0 0.0
    %1417 = vmatprep.subr.mxu0 0.0
    %1418 = vmatpush1.msra.mxu0 0.0
    %1419 = vmatprep.subr.mxu0 0.0
    %1420 = vmatpush1.msra.mxu0 0.0
    %1421 = vmatprep.subr.mxu0 0.0
    %1422 = vmatpush1.msra.mxu0 0.0
    %1423 = vmatprep.subr.mxu0 0.0
    %1424 = vmatpush1.msra.mxu0 0.0
    %1425 = vmatprep.subr.mxu0 0.0
    %1426 = vmatpush1.msra.mxu0 0.0
    %1427 = vmatprep.subr.mxu0 0.0
    %1428 = vmatpush1.msra.mxu0 0.0
    %1429 = vmatprep.subr.mxu0 0.0
    %1430 = vmatpush1.msra.mxu0 0.0
    %1431 = vmatprep.subr.mxu0 0.0
    %1432 = vmatpush1.msra.mxu0 0.0
    %1433 = vmatprep.subr.mxu0 0.0
    %1434 = vmatpush1.msra.mxu0 0.0
    %1435 = vmatprep.subr.mxu0 0.0
    %1436 = vmatpush1.msra.mxu0 0.0
    %1437 = vmatprep.subr.mxu0 0.0
    %1438 = vmatpush1.msra.mxu0 0.0
    %1439 = vmatprep.subr.mxu0 0.0
    %1440 = vmatpush1.msra.mxu0 0.0
    %1441 = vmatprep.subr.mxu0 0.0
    %1442 = vmatpush1.msra.mxu0 0.0
    %1443 = vmatprep.subr.mxu0 0.0
    %1444 = vmatpush1.msra.mxu0 0.0
    %1445 = vmatprep.subr.mxu0 0.0
    %1446 = vmatpush1.msra.mxu0 0.0
    %1447 = vmatprep.subr.mxu0 0.0
    %1448 = vmatpush1.msra.mxu0 0.0
    %1449 = vmatprep.subr.mxu0 0.0
    %1450 = vmatpush1.msra.mxu0 0.0
    %1451 = vmatprep.subr.mxu0 0.0
    %1452 = vmatpush1.msra.mxu0 0.0
    %1453 = vmatprep.subr.mxu0 0.0
    %1454 = vmatpush1.msra.mxu0 0.0
    %1455 = vmatprep.subr.mxu0 0.0
    %1456 = vmatpush1.msra.mxu0 0.0
    %1457 = vmatprep.subr.mxu0 0.0
    %1458 = vmatpush1.msra.mxu0 0.0
    %1459 = vmatprep.subr.mxu0 0.0
    %1460 = vmatpush1.msra.mxu0 0.0
    %1461 = vmatprep.subr.mxu0 0.0
    %1462 = vmatpush1.msra.mxu0 0.0
    %1463 = vmatprep.subr.mxu0 0.0
    %1464 = vmatpush1.msra.mxu0 0.0
    %1465 = vmatprep.subr.mxu0 0.0
    %1466 = vmatpush1.msra.mxu0 0.0
    %1467 = vmatprep.subr.mxu0 0.0
    %1468 = vmatpush1.msra.mxu0 0.0
    %1469 = vmatprep.subr.mxu0 0.0
    %1470 = vmatpush1.msra.mxu0 0.0
    %1471 = vmatprep.mubr.f32.mxu0 0.0
    %1472 = vmatmul.mubr.f32.gmra.mrb[0].mxu0 %v1405
    %v1473 = vpop.f32.mrb[0].mxu0
    %v1474 = vadd.f32 0.0, %v1473
    %v1475 = vpop.f32.mrb[0].mxu0
    %1476 = vdwg.mxu0
    %v1477 = vadd.f32 %v1157, %v1474
    %v1478 = vxor.u32 %v1477, 2147483648
    %v1479 = vmul.f32 %v1478, 1.442695
    %v1480 = vpow.pop %v1479
    %v1481 = vadd.f32 %v1480, 1.0
    %v1482 = vrcp.pop %v1481
    %v1483 = vmul.f32 1.0, %v1482
    %v1484 = vadd.f32 %v1474, %v1275
    %1486 = vrot.lane.b32.xlu0 %v1484, 64
    %v1487 = vpop.permute.xlu0 %1486
    %v1489 = vmul.f32 %v1483, %v1487
    %1491 = vrot.lane.b32.xlu0 %v1489, 64
    %v1492 = vpop.permute.xlu0 %1491
    %v1494 = vadd.f32 %v1157, %v1492
    %v1495 = vtanh.pop %v1494
    %v1496 = vsub.f32 1.0, %v1483
    %1498 = vrot.lane.b32.xlu0 %v1495, 96
    %v1499 = vpop.permute.xlu0 %1498
    %v1501 = vmul.f32 %v1496, %v1499
    %v1502 = vmul.f32 %v1483, %v1401
    %v1503 = vadd.f32 %v1501, %v1502
    %1505 = vrot.lane.b32.xlu0 %v1503, 96
    %v1506 = vpop.permute.xlu0 %1505
    %v1507 = vsel %vm235, %v1506, 0
    %1509 = vmatprep.subr.mxu0 0.0
    %1510 = vmatpush1.msra.mxu0 %v1066
    %1511 = vmatprep.subr.mxu0 0.0
    %1512 = vmatpush1.msra.mxu0 %v1067
    %1513 = vmatprep.subr.mxu0 0.0
    %1514 = vmatpush1.msra.mxu0 %v1068
    %1515 = vmatprep.subr.mxu0 0.0
    %1516 = vmatpush1.msra.mxu0 %v1069
    %1517 = vmatprep.subr.mxu0 0.0
    %1518 = vmatpush1.msra.mxu0 0.0
    %1519 = vmatprep.subr.mxu0 0.0
    %1520 = vmatpush1.msra.mxu0 0.0
    %1521 = vmatprep.subr.mxu0 0.0
    %1522 = vmatpush1.msra.mxu0 0.0
    %1523 = vmatprep.subr.mxu0 0.0
    %1524 = vmatpush1.msra.mxu0 0.0
    %1525 = vmatprep.subr.mxu0 0.0
    %1526 = vmatpush1.msra.mxu0 0.0
    %1527 = vmatprep.subr.mxu0 0.0
    %1528 = vmatpush1.msra.mxu0 0.0
    %1529 = vmatprep.subr.mxu0 0.0
    %1530 = vmatpush1.msra.mxu0 0.0
    %1531 = vmatprep.subr.mxu0 0.0
    %1532 = vmatpush1.msra.mxu0 0.0
    %1533 = vmatprep.subr.mxu0 0.0
    %1534 = vmatpush1.msra.mxu0 0.0
    %1535 = vmatprep.subr.mxu0 0.0
    %1536 = vmatpush1.msra.mxu0 0.0
    %1537 = vmatprep.subr.mxu0 0.0
    %1538 = vmatpush1.msra.mxu0 0.0
    %1539 = vmatprep.subr.mxu0 0.0
    %1540 = vmatpush1.msra.mxu0 0.0
    %1541 = vmatprep.subr.mxu0 0.0
    %1542 = vmatpush1.msra.mxu0 0.0
    %1543 = vmatprep.subr.mxu0 0.0
    %1544 = vmatpush1.msra.mxu0 0.0
    %1545 = vmatprep.subr.mxu0 0.0
    %1546 = vmatpush1.msra.mxu0 0.0
    %1547 = vmatprep.subr.mxu0 0.0
    %1548 = vmatpush1.msra.mxu0 0.0
    %1549 = vmatprep.subr.mxu0 0.0
    %1550 = vmatpush1.msra.mxu0 0.0
    %1551 = vmatprep.subr.mxu0 0.0
    %1552 = vmatpush1.msra.mxu0 0.0
    %1553 = vmatprep.subr.mxu0 0.0
    %1554 = vmatpush1.msra.mxu0 0.0
    %1555 = vmatprep.subr.mxu0 0.0
    %1556 = vmatpush1.msra.mxu0 0.0
    %1557 = vmatprep.subr.mxu0 0.0
    %1558 = vmatpush1.msra.mxu0 0.0
    %1559 = vmatprep.subr.mxu0 0.0
    %1560 = vmatpush1.msra.mxu0 0.0
    %1561 = vmatprep.subr.mxu0 0.0
    %1562 = vmatpush1.msra.mxu0 0.0
    %1563 = vmatprep.subr.mxu0 0.0
    %1564 = vmatpush1.msra.mxu0 0.0
    %1565 = vmatprep.subr.mxu0 0.0
    %1566 = vmatpush1.msra.mxu0 0.0
    %1567 = vmatprep.subr.mxu0 0.0
    %1568 = vmatpush1.msra.mxu0 0.0
    %1569 = vmatprep.subr.mxu0 0.0
    %1570 = vmatpush1.msra.mxu0 0.0
    %1571 = vmatprep.subr.mxu0 0.0
    %1572 = vmatpush1.msra.mxu0 0.0
    %1573 = vmatprep.mubr.f32.mxu0 0.0
    %1574 = vmatmul.mubr.f32.gmra.mrb[0].mxu0 %v1507
    %v1575 = vpop.f32.mrb[0].mxu0
    %v1576 = vadd.f32 0.0, %v1575
    %v1577 = vpop.f32.mrb[0].mxu0
    %1578 = vdwg.mxu0
    %v1579 = vadd.f32 %v1162, %v1576
    %v1580 = vxor.u32 %v1579, 2147483648
    %v1581 = vmul.f32 %v1580, 1.442695
    %v1582 = vpow.pop %v1581
    %v1583 = vadd.f32 %v1582, 1.0
    %v1584 = vrcp.pop %v1583
    %v1585 = vmul.f32 1.0, %v1584
    %v1586 = vadd.f32 %v1576, %v1275
    %1588 = vrot.lane.b32.xlu0 %v1586, 64
    %v1589 = vpop.permute.xlu0 %1588
    %v1591 = vmul.f32 %v1585, %v1589
    %1593 = vrot.lane.b32.xlu0 %v1591, 64
    %v1594 = vpop.permute.xlu0 %1593
    %v1596 = vadd.f32 %v1162, %v1594
    %v1597 = vtanh.pop %v1596
    %v1598 = vsub.f32 1.0, %v1585
    %1600 = vrot.lane.b32.xlu0 %v1597, 96
    %v1601 = vpop.permute.xlu0 %1600
    %v1603 = vmul.f32 %v1598, %v1601
    %v1604 = vmul.f32 %v1585, %v1503
    %v1605 = vadd.f32 %v1603, %v1604
    %1607 = vrot.lane.b32.xlu0 %v1605, 96
    %v1608 = vpop.permute.xlu0 %1607
    %v1609 = vsel %vm235, %v1608, 0
    %1611 = vmatprep.subr.mxu0 0.0
    %1612 = vmatpush1.msra.mxu0 %v1066
    %1613 = vmatprep.subr.mxu0 0.0
    %1614 = vmatpush1.msra.mxu0 %v1067
    %1615 = vmatprep.subr.mxu0 0.0
    %1616 = vmatpush1.msra.mxu0 %v1068
    %1617 = vmatprep.subr.mxu0 0.0
    %1618 = vmatpush1.msra.mxu0 %v1069
    %1619 = vmatprep.subr.mxu0 0.0
    %1620 = vmatpush1.msra.mxu0 0.0
    %1621 = vmatprep.subr.mxu0 0.0
    %1622 = vmatpush1.msra.mxu0 0.0
    %1623 = vmatprep.subr.mxu0 0.0
    %1624 = vmatpush1.msra.mxu0 0.0
    %1625 = vmatprep.subr.mxu0 0.0
    %1626 = vmatpush1.msra.mxu0 0.0
    %1627 = vmatprep.subr.mxu0 0.0
    %1628 = vmatpush1.msra.mxu0 0.0
    %1629 = vmatprep.subr.mxu0 0.0
    %1630 = vmatpush1.msra.mxu0 0.0
    %1631 = vmatprep.subr.mxu0 0.0
    %1632 = vmatpush1.msra.mxu0 0.0
    %1633 = vmatprep.subr.mxu0 0.0
    %1634 = vmatpush1.msra.mxu0 0.0
    %1635 = vmatprep.subr.mxu0 0.0
    %1636 = vmatpush1.msra.mxu0 0.0
    %1637 = vmatprep.subr.mxu0 0.0
    %1638 = vmatpush1.msra.mxu0 0.0
    %1639 = vmatprep.subr.mxu0 0.0
    %1640 = vmatpush1.msra.mxu0 0.0
    %1641 = vmatprep.subr.mxu0 0.0
    %1642 = vmatpush1.msra.mxu0 0.0
    %1643 = vmatprep.subr.mxu0 0.0
    %1644 = vmatpush1.msra.mxu0 0.0
    %1645 = vmatprep.subr.mxu0 0.0
    %1646 = vmatpush1.msra.mxu0 0.0
    %1647 = vmatprep.subr.mxu0 0.0
    %1648 = vmatpush1.msra.mxu0 0.0
    %1649 = vmatprep.subr.mxu0 0.0
    %1650 = vmatpush1.msra.mxu0 0.0
    %1651 = vmatprep.subr.mxu0 0.0
    %1652 = vmatpush1.msra.mxu0 0.0
    %1653 = vmatprep.subr.mxu0 0.0
    %1654 = vmatpush1.msra.mxu0 0.0
    %1655 = vmatprep.subr.mxu0 0.0
    %1656 = vmatpush1.msra.mxu0 0.0
    %1657 = vmatprep.subr.mxu0 0.0
    %1658 = vmatpush1.msra.mxu0 0.0
    %1659 = vmatprep.subr.mxu0 0.0
    %1660 = vmatpush1.msra.mxu0 0.0
    %1661 = vmatprep.subr.mxu0 0.0
    %1662 = vmatpush1.msra.mxu0 0.0
    %1663 = vmatprep.subr.mxu0 0.0
    %1664 = vmatpush1.msra.mxu0 0.0
    %1665 = vmatprep.subr.mxu0 0.0
    %1666 = vmatpush1.msra.mxu0 0.0
    %1667 = vmatprep.subr.mxu0 0.0
    %1668 = vmatpush1.msra.mxu0 0.0
    %1669 = vmatprep.subr.mxu0 0.0
    %1670 = vmatpush1.msra.mxu0 0.0
    %1671 = vmatprep.subr.mxu0 0.0
    %1672 = vmatpush1.msra.mxu0 0.0
    %1673 = vmatprep.subr.mxu0 0.0
    %1674 = vmatpush1.msra.mxu0 0.0
    %1675 = vmatprep.mubr.f32.mxu0 0.0
    %1676 = vmatmul.mubr.f32.gmra.mrb[0].mxu0 %v1609
    %v1677 = vpop.f32.mrb[0].mxu0
    %v1678 = vadd.f32 0.0, %v1677
    %v1679 = vpop.f32.mrb[0].mxu0
    %1680 = vdwg.mxu0
    %v1681 = vadd.f32 %v1167, %v1678
    %v1682 = vxor.u32 %v1681, 2147483648
    %v1683 = vmul.f32 %v1682, 1.442695
    %v1684 = vpow.pop %v1683
    %v1685 = vadd.f32 %v1684, 1.0
    %v1686 = vrcp.pop %v1685
    %v1687 = vmul.f32 1.0, %v1686
    %v1688 = vadd.f32 %v1678, %v1275
    %1690 = vrot.lane.b32.xlu0 %v1688, 64
    %v1691 = vpop.permute.xlu0 %1690
    %v1693 = vmul.f32 %v1687, %v1691
    %1695 = vrot.lane.b32.xlu0 %v1693, 64
    %v1696 = vpop.permute.xlu0 %1695
    %v1698 = vadd.f32 %v1167, %v1696
    %v1699 = vtanh.pop %v1698
    %v1700 = vsub.f32 1.0, %v1687
    %1702 = vrot.lane.b32.xlu0 %v1699, 96
    %v1703 = vpop.permute.xlu0 %1702
    %v1705 = vmul.f32 %v1700, %v1703
    %v1706 = vmul.f32 %v1687, %v1605
    %v1707 = vadd.f32 %v1705, %v1706
    %1709 = vrot.lane.b32.xlu0 %v1707, 96
    %v1710 = vpop.permute.xlu0 %1709
    %v1711 = vsel %vm235, %v1710, 0
    %1713 = vmatprep.subr.mxu0 0.0
    %1714 = vmatpush1.msra.mxu0 %v1066
    %1715 = vmatprep.subr.mxu0 0.0
    %1716 = vmatpush1.msra.mxu0 %v1067
    %1717 = vmatprep.subr.mxu0 0.0
    %1718 = vmatpush1.msra.mxu0 %v1068
    %1719 = vmatprep.subr.mxu0 0.0
    %1720 = vmatpush1.msra.mxu0 %v1069
    %1721 = vmatprep.subr.mxu0 0.0
    %1722 = vmatpush1.msra.mxu0 0.0
    %1723 = vmatprep.subr.mxu0 0.0
    %1724 = vmatpush1.msra.mxu0 0.0
    %1725 = vmatprep.subr.mxu0 0.0
    %1726 = vmatpush1.msra.mxu0 0.0
    %1727 = vmatprep.subr.mxu0 0.0
    %1728 = vmatpush1.msra.mxu0 0.0
    %1729 = vmatprep.subr.mxu0 0.0
    %1730 = vmatpush1.msra.mxu0 0.0
    %1731 = vmatprep.subr.mxu0 0.0
    %1732 = vmatpush1.msra.mxu0 0.0
    %1733 = vmatprep.subr.mxu0 0.0
    %1734 = vmatpush1.msra.mxu0 0.0
    %1735 = vmatprep.subr.mxu0 0.0
    %1736 = vmatpush1.msra.mxu0 0.0
    %1737 = vmatprep.subr.mxu0 0.0
    %1738 = vmatpush1.msra.mxu0 0.0
    %1739 = vmatprep.subr.mxu0 0.0
    %1740 = vmatpush1.msra.mxu0 0.0
    %1741 = vmatprep.subr.mxu0 0.0
    %1742 = vmatpush1.msra.mxu0 0.0
    %1743 = vmatprep.subr.mxu0 0.0
    %1744 = vmatpush1.msra.mxu0 0.0
    %1745 = vmatprep.subr.mxu0 0.0
    %1746 = vmatpush1.msra.mxu0 0.0
    %1747 = vmatprep.subr.mxu0 0.0
    %1748 = vmatpush1.msra.mxu0 0.0
    %1749 = vmatprep.subr.mxu0 0.0
    %1750 = vmatpush1.msra.mxu0 0.0
    %1751 = vmatprep.subr.mxu0 0.0
    %1752 = vmatpush1.msra.mxu0 0.0
    %1753 = vmatprep.subr.mxu0 0.0
    %1754 = vmatpush1.msra.mxu0 0.0
    %1755 = vmatprep.subr.mxu0 0.0
    %1756 = vmatpush1.msra.mxu0 0.0
    %1757 = vmatprep.subr.mxu0 0.0
    %1758 = vmatpush1.msra.mxu0 0.0
    %1759 = vmatprep.subr.mxu0 0.0
    %1760 = vmatpush1.msra.mxu0 0.0
    %1761 = vmatprep.subr.mxu0 0.0
    %1762 = vmatpush1.msra.mxu0 0.0
    %1763 = vmatprep.subr.mxu0 0.0
    %1764 = vmatpush1.msra.mxu0 0.0
    %1765 = vmatprep.subr.mxu0 0.0
    %1766 = vmatpush1.msra.mxu0 0.0
    %1767 = vmatprep.subr.mxu0 0.0
    %1768 = vmatpush1.msra.mxu0 0.0
    %1769 = vmatprep.subr.mxu0 0.0
    %1770 = vmatpush1.msra.mxu0 0.0
    %1771 = vmatprep.subr.mxu0 0.0
    %1772 = vmatpush1.msra.mxu0 0.0
    %1773 = vmatprep.subr.mxu0 0.0
    %1774 = vmatpush1.msra.mxu0 0.0
    %1775 = vmatprep.subr.mxu0 0.0
    %1776 = vmatpush1.msra.mxu0 0.0
    %1777 = vmatprep.mubr.f32.mxu0 0.0
    %1778 = vmatmul.mubr.f32.gmra.mrb[0].mxu0 %v1711
    %v1779 = vpop.f32.mrb[0].mxu0
    %v1780 = vadd.f32 0.0, %v1779
    %v1781 = vpop.f32.mrb[0].mxu0
    %1782 = vdwg.mxu0
    %v1783 = vadd.f32 %v1172, %v1780
    %v1784 = vxor.u32 %v1783, 2147483648
    %v1785 = vmul.f32 %v1784, 1.442695
    %v1786 = vpow.pop %v1785
    %v1787 = vadd.f32 %v1786, 1.0
    %v1788 = vrcp.pop %v1787
    %v1789 = vmul.f32 1.0, %v1788
    %v1790 = vadd.f32 %v1780, %v1275
    %1792 = vrot.lane.b32.xlu0 %v1790, 64
    %v1793 = vpop.permute.xlu0 %1792
    %v1795 = vmul.f32 %v1789, %v1793
    %1797 = vrot.lane.b32.xlu0 %v1795, 64
    %v1798 = vpop.permute.xlu0 %1797
    %v1800 = vadd.f32 %v1172, %v1798
    %v1801 = vtanh.pop %v1800
    %v1802 = vsub.f32 1.0, %v1789
    %1804 = vrot.lane.b32.xlu0 %v1801, 96
    %v1805 = vpop.permute.xlu0 %1804
    %v1807 = vmul.f32 %v1802, %v1805
    %v1808 = vmul.f32 %v1789, %v1707
    %v1809 = vadd.f32 %v1807, %v1808
    %1811 = vrot.lane.b32.xlu0 %v1809, 96
    %v1812 = vpop.permute.xlu0 %1811
    %v1813 = vsel %vm235, %v1812, 0
    %1815 = vmatprep.subr.mxu0 0.0
    %1816 = vmatpush1.msra.mxu0 %v1066
    %1817 = vmatprep.subr.mxu0 0.0
    %1818 = vmatpush1.msra.mxu0 %v1067
    %1819 = vmatprep.subr.mxu0 0.0
    %1820 = vmatpush1.msra.mxu0 %v1068
    %1821 = vmatprep.subr.mxu0 0.0
    %1822 = vmatpush1.msra.mxu0 %v1069
    %1823 = vmatprep.subr.mxu0 0.0
    %1824 = vmatpush1.msra.mxu0 0.0
    %1825 = vmatprep.subr.mxu0 0.0
    %1826 = vmatpush1.msra.mxu0 0.0
    %1827 = vmatprep.subr.mxu0 0.0
    %1828 = vmatpush1.msra.mxu0 0.0
    %1829 = vmatprep.subr.mxu0 0.0
    %1830 = vmatpush1.msra.mxu0 0.0
    %1831 = vmatprep.subr.mxu0 0.0
    %1832 = vmatpush1.msra.mxu0 0.0
    %1833 = vmatprep.subr.mxu0 0.0
    %1834 = vmatpush1.msra.mxu0 0.0
    %1835 = vmatprep.subr.mxu0 0.0
    %1836 = vmatpush1.msra.mxu0 0.0
    %1837 = vmatprep.subr.mxu0 0.0
    %1838 = vmatpush1.msra.mxu0 0.0
    %1839 = vmatprep.subr.mxu0 0.0
    %1840 = vmatpush1.msra.mxu0 0.0
    %1841 = vmatprep.subr.mxu0 0.0
    %1842 = vmatpush1.msra.mxu0 0.0
    %1843 = vmatprep.subr.mxu0 0.0
    %1844 = vmatpush1.msra.mxu0 0.0
    %1845 = vmatprep.subr.mxu0 0.0
    %1846 = vmatpush1.msra.mxu0 0.0
    %1847 = vmatprep.subr.mxu0 0.0
    %1848 = vmatpush1.msra.mxu0 0.0
    %1849 = vmatprep.subr.mxu0 0.0
    %1850 = vmatpush1.msra.mxu0 0.0
    %1851 = vmatprep.subr.mxu0 0.0
    %1852 = vmatpush1.msra.mxu0 0.0
    %1853 = vmatprep.subr.mxu0 0.0
    %1854 = vmatpush1.msra.mxu0 0.0
    %1855 = vmatprep.subr.mxu0 0.0
    %1856 = vmatpush1.msra.mxu0 0.0
    %1857 = vmatprep.subr.mxu0 0.0
    %1858 = vmatpush1.msra.mxu0 0.0
    %1859 = vmatprep.subr.mxu0 0.0
    %1860 = vmatpush1.msra.mxu0 0.0
    %1861 = vmatprep.subr.mxu0 0.0
    %1862 = vmatpush1.msra.mxu0 0.0
    %1863 = vmatprep.subr.mxu0 0.0
    %1864 = vmatpush1.msra.mxu0 0.0
    %1865 = vmatprep.subr.mxu0 0.0
    %1866 = vmatpush1.msra.mxu0 0.0
    %1867 = vmatprep.subr.mxu0 0.0
    %1868 = vmatpush1.msra.mxu0 0.0
    %1869 = vmatprep.subr.mxu0 0.0
    %1870 = vmatpush1.msra.mxu0 0.0
    %1871 = vmatprep.subr.mxu0 0.0
    %1872 = vmatpush1.msra.mxu0 0.0
    %1873 = vmatprep.subr.mxu0 0.0
    %1874 = vmatpush1.msra.mxu0 0.0
    %1875 = vmatprep.subr.mxu0 0.0
    %1876 = vmatpush1.msra.mxu0 0.0
    %1877 = vmatprep.subr.mxu0 0.0
    %1878 = vmatpush1.msra.mxu0 0.0
    %1879 = vmatprep.mubr.f32.mxu0 0.0
    %1880 = vmatmul.mubr.f32.gmra.mrb[0].mxu0 %v1813
    %v1881 = vpop.f32.mrb[0].mxu0
    %v1882 = vadd.f32 0.0, %v1881
    %v1883 = vpop.f32.mrb[0].mxu0
    %1884 = vdwg.mxu0
    %v1885 = vadd.f32 %v1177, %v1882
    %v1886 = vxor.u32 %v1885, 2147483648
    %v1887 = vmul.f32 %v1886, 1.442695
    %v1888 = vpow.pop %v1887
    %v1889 = vadd.f32 %v1888, 1.0
    %v1890 = vrcp.pop %v1889
    %v1891 = vmul.f32 1.0, %v1890
    %v1892 = vadd.f32 %v1882, %v1275
    %1894 = vrot.lane.b32.xlu0 %v1892, 64
    %v1895 = vpop.permute.xlu0 %1894
    %v1897 = vmul.f32 %v1891, %v1895
    %1899 = vrot.lane.b32.xlu0 %v1897, 64
    %v1900 = vpop.permute.xlu0 %1899
    %v1902 = vadd.f32 %v1177, %v1900
    %v1903 = vtanh.pop %v1902
    %v1904 = vsub.f32 1.0, %v1891
    %1906 = vrot.lane.b32.xlu0 %v1903, 96
    %v1907 = vpop.permute.xlu0 %1906
    %v1909 = vmul.f32 %v1904, %v1907
    %v1910 = vmul.f32 %v1891, %v1809
    %v1911 = vadd.f32 %v1909, %v1910
    %1913 = vrot.lane.b32.xlu0 %v1911, 96
    %v1914 = vpop.permute.xlu0 %1913
    %v1915 = vsel %vm235, %v1914, 0
    %1917 = vmatprep.subr.mxu0 0.0
    %1918 = vmatpush1.msra.mxu0 %v1066
    %1919 = vmatprep.subr.mxu0 0.0
    %1920 = vmatpush1.msra.mxu0 %v1067
    %1921 = vmatprep.subr.mxu0 0.0
    %1922 = vmatpush1.msra.mxu0 %v1068
    %1923 = vmatprep.subr.mxu0 0.0
    %1924 = vmatpush1.msra.mxu0 %v1069
    %1925 = vmatprep.subr.mxu0 0.0
    %1926 = vmatpush1.msra.mxu0 0.0
    %1927 = vmatprep.subr.mxu0 0.0
    %1928 = vmatpush1.msra.mxu0 0.0
    %1929 = vmatprep.subr.mxu0 0.0
    %1930 = vmatpush1.msra.mxu0 0.0
    %1931 = vmatprep.subr.mxu0 0.0
    %1932 = vmatpush1.msra.mxu0 0.0
    %1933 = vmatprep.subr.mxu0 0.0
    %1934 = vmatpush1.msra.mxu0 0.0
    %1935 = vmatprep.subr.mxu0 0.0
    %1936 = vmatpush1.msra.mxu0 0.0
    %1937 = vmatprep.subr.mxu0 0.0
    %1938 = vmatpush1.msra.mxu0 0.0
    %1939 = vmatprep.subr.mxu0 0.0
    %1940 = vmatpush1.msra.mxu0 0.0
    %1941 = vmatprep.subr.mxu0 0.0
    %1942 = vmatpush1.msra.mxu0 0.0
    %1943 = vmatprep.subr.mxu0 0.0
    %1944 = vmatpush1.msra.mxu0 0.0
    %1945 = vmatprep.subr.mxu0 0.0
    %1946 = vmatpush1.msra.mxu0 0.0
    %1947 = vmatprep.subr.mxu0 0.0
    %1948 = vmatpush1.msra.mxu0 0.0
    %1949 = vmatprep.subr.mxu0 0.0
    %1950 = vmatpush1.msra.mxu0 0.0
    %1951 = vmatprep.subr.mxu0 0.0
    %1952 = vmatpush1.msra.mxu0 0.0
    %1953 = vmatprep.subr.mxu0 0.0
    %1954 = vmatpush1.msra.mxu0 0.0
    %1955 = vmatprep.subr.mxu0 0.0
    %1956 = vmatpush1.msra.mxu0 0.0
    %1957 = vmatprep.subr.mxu0 0.0
    %1958 = vmatpush1.msra.mxu0 0.0
    %1959 = vmatprep.subr.mxu0 0.0
    %1960 = vmatpush1.msra.mxu0 0.0
    %1961 = vmatprep.subr.mxu0 0.0
    %1962 = vmatpush1.msra.mxu0 0.0
    %1963 = vmatprep.subr.mxu0 0.0
    %1964 = vmatpush1.msra.mxu0 0.0
    %1965 = vmatprep.subr.mxu0 0.0
    %1966 = vmatpush1.msra.mxu0 0.0
    %1967 = vmatprep.subr.mxu0 0.0
    %1968 = vmatpush1.msra.mxu0 0.0
    %1969 = vmatprep.subr.mxu0 0.0
    %1970 = vmatpush1.msra.mxu0 0.0
    %1971 = vmatprep.subr.mxu0 0.0
    %1972 = vmatpush1.msra.mxu0 0.0
    %1973 = vmatprep.subr.mxu0 0.0
    %1974 = vmatpush1.msra.mxu0 0.0
    %1975 = vmatprep.subr.mxu0 0.0
    %1976 = vmatpush1.msra.mxu0 0.0
    %1977 = vmatprep.subr.mxu0 0.0
    %1978 = vmatpush1.msra.mxu0 0.0
    %1979 = vmatprep.subr.mxu0 0.0
    %1980 = vmatpush1.msra.mxu0 0.0
    %1981 = vmatprep.mubr.f32.mxu0 0.0
    %1982 = vmatmul.mubr.f32.gmra.mrb[0].mxu0 %v1915
    %v1983 = vpop.f32.mrb[0].mxu0
    %v1984 = vadd.f32 0.0, %v1983
    %v1985 = vpop.f32.mrb[0].mxu0
    %1986 = vdwg.mxu0
    %v1987 = vadd.f32 %v1182, %v1984
    %v1988 = vxor.u32 %v1987, 2147483648
    %v1989 = vmul.f32 %v1988, 1.442695
    %v1990 = vpow.pop %v1989
    %v1991 = vadd.f32 %v1990, 1.0
    %v1992 = vrcp.pop %v1991
    %v1993 = vmul.f32 1.0, %v1992
    %v1994 = vadd.f32 %v1984, %v1275
    %1996 = vrot.lane.b32.xlu0 %v1994, 64
    %v1997 = vpop.permute.xlu0 %1996
    %v1999 = vmul.f32 %v1993, %v1997
    %2001 = vrot.lane.b32.xlu0 %v1999, 64
    %v2002 = vpop.permute.xlu0 %2001
    %v2004 = vadd.f32 %v1182, %v2002
    %v2005 = vtanh.pop %v2004
    %v2006 = vsub.f32 1.0, %v1993
    %2008 = vrot.lane.b32.xlu0 %v2005, 96
    %v2009 = vpop.permute.xlu0 %2008
    %v2011 = vmul.f32 %v2006, %v2009
    %v2012 = vmul.f32 %v1993, %v1911
    %v2013 = vadd.f32 %v2011, %v2012
    %2015 = vrot.lane.b32.xlu0 %v2013, 96
    %v2016 = vpop.permute.xlu0 %2015
    %s2018 = scalar_lea.vmem [#allocation9], 8
    %2019 = vst.msk [vmem:[%s2018] sm:$0xff] %vm235, %v2016
    %v2020 = vld [vmem:[%s7] sm:$0xff]
    %v2021 = vld [vmem:[%s7 + $0x8] sm:$0xff]
    %v2022 = vld [vmem:[%s7 + $0x10] sm:$0xff]
    %v2023 = vld [vmem:[%s7 + $0x18] sm:$0xff]
    %v2024 = vld [vmem:[%s8] sm:$0x1]
    %v2026 = vlaneseq
    %v2027 = vshrl.u32 %v2026, 7
    %v2028 = vsub.s32 0, %v2027
    %v2029 = vrot.slane %v2024, %v2028
    %v2031 = vsel %vm235, %v2016, 0
    %2033 = vmatprep.subr.mxu0 0.0
    %2034 = vmatpush1.msra.mxu0 %v2020
    %2035 = vmatprep.subr.mxu0 0.0
    %2036 = vmatpush1.msra.mxu0 %v2021
    %2037 = vmatprep.subr.mxu0 0.0
    %2038 = vmatpush1.msra.mxu0 %v2022
    %2039 = vmatprep.subr.mxu0 0.0
    %2040 = vmatpush1.msra.mxu0 %v2023
    %2041 = vmatprep.subr.mxu0 0.0
    %2042 = vmatpush1.msra.mxu0 0.0
    %2043 = vmatprep.subr.mxu0 0.0
    %2044 = vmatpush1.msra.mxu0 0.0
    %2045 = vmatprep.subr.mxu0 0.0
    %2046 = vmatpush1.msra.mxu0 0.0
    %2047 = vmatprep.subr.mxu0 0.0
    %2048 = vmatpush1.msra.mxu0 0.0
    %2049 = vmatprep.subr.mxu0 0.0
    %2050 = vmatpush1.msra.mxu0 0.0
    %2051 = vmatprep.subr.mxu0 0.0
    %2052 = vmatpush1.msra.mxu0 0.0
    %2053 = vmatprep.subr.mxu0 0.0
    %2054 = vmatpush1.msra.mxu0 0.0
    %2055 = vmatprep.subr.mxu0 0.0
    %2056 = vmatpush1.msra.mxu0 0.0
    %2057 = vmatprep.subr.mxu0 0.0
    %2058 = vmatpush1.msra.mxu0 0.0
    %2059 = vmatprep.subr.mxu0 0.0
    %2060 = vmatpush1.msra.mxu0 0.0
    %2061 = vmatprep.subr.mxu0 0.0
    %2062 = vmatpush1.msra.mxu0 0.0
    %2063 = vmatprep.subr.mxu0 0.0
    %2064 = vmatpush1.msra.mxu0 0.0
    %2065 = vmatprep.subr.mxu0 0.0
    %2066 = vmatpush1.msra.mxu0 0.0
    %2067 = vmatprep.subr.mxu0 0.0
    %2068 = vmatpush1.msra.mxu0 0.0
    %2069 = vmatprep.subr.mxu0 0.0
    %2070 = vmatpush1.msra.mxu0 0.0
    %2071 = vmatprep.subr.mxu0 0.0
    %2072 = vmatpush1.msra.mxu0 0.0
    %2073 = vmatprep.subr.mxu0 0.0
    %2074 = vmatpush1.msra.mxu0 0.0
    %2075 = vmatprep.subr.mxu0 0.0
    %2076 = vmatpush1.msra.mxu0 0.0
    %2077 = vmatprep.subr.mxu0 0.0
    %2078 = vmatpush1.msra.mxu0 0.0
    %2079 = vmatprep.subr.mxu0 0.0
    %2080 = vmatpush1.msra.mxu0 0.0
    %2081 = vmatprep.subr.mxu0 0.0
    %2082 = vmatpush1.msra.mxu0 0.0
    %2083 = vmatprep.subr.mxu0 0.0
    %2084 = vmatpush1.msra.mxu0 0.0
    %2085 = vmatprep.subr.mxu0 0.0
    %2086 = vmatpush1.msra.mxu0 0.0
    %2087 = vmatprep.subr.mxu0 0.0
    %2088 = vmatpush1.msra.mxu0 0.0
    %2089 = vmatprep.subr.mxu0 0.0
    %2090 = vmatpush1.msra.mxu0 0.0
    %2091 = vmatprep.subr.mxu0 0.0
    %2092 = vmatpush1.msra.mxu0 0.0
    %2093 = vmatprep.subr.mxu0 0.0
    %2094 = vmatpush1.msra.mxu0 0.0
    %2095 = vmatprep.subr.mxu0 0.0
    %2096 = vmatpush1.msra.mxu0 0.0
    %2097 = vmatprep.mubr.f32.mxu0 0.0
    %2098 = vmatmul.mubr.f32.gmra.mrb[0].mxu0 %v1303
    %v2099 = vpop.f32.mrb[0].mxu0
    %v2100 = vadd.f32 %v2029, %v2099
    %v2101 = vpop.f32.mrb[0].mxu0
    %2102 = vmatprep.mubr.f32.mxu0 0.0
    %2103 = vmatmul.mubr.f32.gmra.mrb[0].mxu0 %v1405
    %v2104 = vpop.f32.mrb[0].mxu0
    %v2105 = vadd.f32 %v2029, %v2104
    %v2106 = vpop.f32.mrb[0].mxu0
    %2107 = vmatprep.mubr.f32.mxu0 0.0
    %2108 = vmatmul.mubr.f32.gmra.mrb[0].mxu0 %v1507
    %v2109 = vpop.f32.mrb[0].mxu0
    %v2110 = vadd.f32 %v2029, %v2109
    %v2111 = vpop.f32.mrb[0].mxu0
    %2112 = vmatprep.mubr.f32.mxu0 0.0
    %2113 = vmatmul.mubr.f32.gmra.mrb[0].mxu0 %v1609
    %v2114 = vpop.f32.mrb[0].mxu0
    %v2115 = vadd.f32 %v2029, %v2114
    %v2116 = vpop.f32.mrb[0].mxu0
    %2117 = vmatprep.mubr.f32.mxu0 0.0
    %2118 = vmatmul.mubr.f32.gmra.mrb[0].mxu0 %v1711
    %v2119 = vpop.f32.mrb[0].mxu0
    %v2120 = vadd.f32 %v2029, %v2119
    %v2121 = vpop.f32.mrb[0].mxu0
    %2122 = vmatprep.mubr.f32.mxu0 0.0
    %2123 = vmatmul.mubr.f32.gmra.mrb[0].mxu0 %v1813
    %v2124 = vpop.f32.mrb[0].mxu0
    %v2125 = vadd.f32 %v2029, %v2124
    %v2126 = vpop.f32.mrb[0].mxu0
    %2127 = vmatprep.mubr.f32.mxu0 0.0
    %2128 = vmatmul.mubr.f32.gmra.mrb[0].mxu0 %v1915
    %v2129 = vpop.f32.mrb[0].mxu0
    %v2130 = vadd.f32 %v2029, %v2129
    %v2131 = vpop.f32.mrb[0].mxu0
    %2132 = vmatprep.mubr.f32.mxu0 0.0
    %2133 = vmatmul.mubr.f32.gmra.mrb[0].mxu0 %v2031
    %v2134 = vpop.f32.mrb[0].mxu0
    %v2135 = vadd.f32 %v2029, %v2134
    %v2136 = vpop.f32.mrb[0].mxu0
    %2137 = vdwg.mxu0
    %2138 = vst [vmem:[#allocation8] sm:$0xff] %v2100
    %2139 = vst [vmem:[#allocation8 + $0x8] sm:$0xff] %v2105
    %2140 = vst [vmem:[#allocation8 + $0x10] sm:$0xff] %v2110
    %2141 = vst [vmem:[#allocation8 + $0x18] sm:$0xff] %v2115
    %2142 = vst [vmem:[#allocation8 + $0x20] sm:$0xff] %v2120
    %2143 = vst [vmem:[#allocation8 + $0x28] sm:$0xff] %v2125
    %2144 = vst [vmem:[#allocation8 + $0x30] sm:$0xff] %v2130
    %2145 = vst [vmem:[#allocation8 + $0x38] sm:$0xff] %v2135
    // Predicated region
    $region50: #{tpu_custom_call.1} parent=1 // pred_check
      _
    $region51: #{tpu_custom_call.1} parent=1 // pred_check_branch
      %2147 = sbr.rel (0) target = $region53
    $region52: #{tpu_custom_call.1} parent=1 // pred_region
      %s2149 = ssub.s32 1024, 1024
      %2150 = vsyncadd [#allocation4], %s2149
      %s2151 = sshll.u32 [#allocation8], 4
      %s2152 = int_to_ptr.vmem [resolvable:$true] %s2151
      %2157 = dma.vmem_to_hbm [thread:$0]  %s2152, 1024, %s9, [#allocation4], 128, 128, 8
    $region53: #{tpu_custom_call.1} parent=1 // pred_fallthru
      _
    // Predicated region
    $region54: #{tpu_custom_call.1} parent=1 // pred_check
      _
    $region55: #{tpu_custom_call.1} parent=1 // pred_check_branch
      %2159 = sbr.rel (0) target = $region57
    $region56: #{tpu_custom_call.1} parent=1 // pred_region
      %s2161 = ssub.s32 256, 256
      %2162 = vsyncadd [#allocation10], %s2161
      %s2163 = sshll.u32 [#allocation9], 4
      %s2164 = int_to_ptr.vmem [resolvable:$true] %s2163
      %2169 = dma.vmem_to_hbm [thread:$0]  %s2164, 256, %s10, [#allocation10], 128, 128, 8
    $region57: #{tpu_custom_call.1} parent=1 // pred_fallthru
      _
    // Predicated region
    $region58: #{tpu_custom_call.1} parent=1 // pred_check
      _
    $region59: #{tpu_custom_call.1} parent=1 // pred_check_branch
      %2171 = sbr.rel (0) target = $region61
    $region60: #{tpu_custom_call.1} parent=1 // pred_region
      %2172 = dma.done [#allocation4], 1024
    $region61: #{tpu_custom_call.1} parent=1 // pred_fallthru
      _
    // Predicated region
    $region62: #{tpu_custom_call.1} parent=1 // pred_check
      _
    $region63: #{tpu_custom_call.1} parent=1 // pred_check_branch
      %2174 = sbr.rel (0) target = $region65
    $region64: #{tpu_custom_call.1} parent=1 // pred_region
      %2175 = dma.done [#allocation10], 256
    $region65: #{tpu_custom_call.1} parent=1 // pred_fallthru
      _
    %2176 = vsyncpa [#allocation3], 1
    %2177 = vsyncpa [#allocation6], 1
    %2178 = vsyncpa [#allocation4], 1
    %2179 = vsyncpa [#allocation10], 1

</llo_original>
